<compile_context>
chip_gen: v7x
topology: tpu7x:2x2x1
jax: 0.10.0
libtpu: 0.0.40
codegen_flags: <defaults>
</compile_context>

<pallas_src>
import jax
import jax.numpy as jnp
from jax import lax
from jax.experimental import pallas as pl
from jax.experimental.pallas import tpu as pltpu


def _make_kernel(HW, HW4, tq, mxu_dtype, exp_dtype):
    def kernel(gamma_ref, x_ref, wth_ref, wphi_ref, wg_ref, wo_ref,
               out_ref, phi_sc, g_sc):
        q = pl.program_id(1)

        # ---------- per-batch prologue: pooled phi / g projections (slab loop) ----------
        @pl.when(q == 0)
        def _():
            phi_max = None
            g_max = None
            for s in range(4):  # static unroll over the four 2x2 window positions
                xs = x_ref[0, pl.ds(s * HW4, HW4), :].astype(mxu_dtype)        # (HW4, C)
                phi_s = jnp.dot(xs, wphi_ref[...],
                                preferred_element_type=jnp.float32)            # (HW4, C8)
                g_s = jnp.dot(xs, wg_ref[...],
                              preferred_element_type=jnp.float32)              # (HW4, C2)
                phi_max = phi_s if phi_max is None else jnp.maximum(phi_max, phi_s)
                g_max = g_s if g_max is None else jnp.maximum(g_max, g_s)
            phi_sc[...] = phi_max.astype(phi_sc.dtype)
            g_sc[...] = g_max.astype(g_sc.dtype)

        # ---------- per-query-tile attention ----------
        q0 = pl.multiple_of(q * tq, tq)
        x_t = x_ref[0, pl.ds(q0, tq), :]                                        # (tq, C)
        theta_t = jnp.dot(x_t.astype(mxu_dtype), wth_ref[...],
                          preferred_element_type=jnp.float32)                   # (tq, C8)

        scores = lax.dot_general(theta_t.astype(mxu_dtype), phi_sc[...],
                                 dimension_numbers=(((1,), (1,)), ((), ())),
                                 preferred_element_type=jnp.float32)            # (tq, HW4)
        m = jnp.max(scores, axis=-1, keepdims=True)                             # f32
        p = jnp.exp((scores - m).astype(exp_dtype))                             # EUP (bf16 on v6e/v7x)
        l = jnp.sum(p, axis=-1, keepdims=True, dtype=jnp.float32)               # (tq, 1) f32

        # readout first, normalise after (EUP reciprocal; avoids (tq, HW4) divides)
        attn_un = jnp.dot(p.astype(mxu_dtype), g_sc[...],
                          preferred_element_type=jnp.float32)                   # (tq, C2)
        attn = attn_un * pl.reciprocal(l, approx=True)
        o = jnp.dot(attn.astype(mxu_dtype), wo_ref[...],
                    preferred_element_type=jnp.float32)                         # (tq, C)

        out_ref[0] = (gamma_ref[0] * o + x_t.astype(jnp.float32)).astype(out_ref.dtype)

    return kernel


def _tpu_vmem_capacity_bytes():
    try:
        return int(pltpu.get_tpu_info().vmem_capacity_bytes)
    except Exception:
        return 64 * 1024 * 1024  # conservative fallback (v7x per-core VMEM)


def self_attention_2d(x_nchw, w_theta, w_phi, w_g, w_o, gamma, *,
                      tq=None, mxu_dtype=jnp.bfloat16):
    """x_nchw: (B, C, H, W); conv weights in PyTorch (out, in) layout; gamma scalar."""
    B, C, H, W = x_nchw.shape
    assert C % 8 == 0 and H % 2 == 0 and W % 2 == 0
    C8, C2 = C // 8, C // 2
    HW, HW4 = H * W, (H * W) // 4
    assert HW4 % 8 == 0, "H*W/4 must be a multiple of 8 for sublane-aligned pooling"

    vmem_cap = _tpu_vmem_capacity_bytes()
    if tq is None:
        # smaller q tiles on 64 MiB-VMEM parts (v7x), bigger on 128 MiB parts (v5e/v6e)
        tq = min(HW, 256 if vmem_cap <= (64 << 20) else 512)
    assert HW % tq == 0 and (tq % 8 == 0 or tq == HW)
    nq = HW // tq

    # ---- layout glue (plain JAX, one transpose each way): tokens ordered
    #      (window position, pooled token) with channels on lanes ----
    x6 = x_nchw.reshape(B, C, H // 2, 2, W // 2, 2)                   # (b,c,h2,dy,w2,dx)
    x_perm = jnp.transpose(x6, (0, 3, 5, 2, 4, 1)).reshape(B, HW, C)  # (b,[dy,dx,h2,w2],c)

    w_theta_t = jnp.transpose(w_theta).astype(mxu_dtype)              # (C, C8)
    w_phi_t = jnp.transpose(w_phi).astype(mxu_dtype)                  # (C, C8)
    w_g_t = jnp.transpose(w_g).astype(mxu_dtype)                      # (C, C2)
    w_o_t = jnp.transpose(w_o).astype(mxu_dtype)                      # (C2, C)
    gamma_arr = jnp.asarray(gamma, jnp.float32).reshape(1)

    exp_dtype = (jnp.bfloat16 if jnp.dtype(mxu_dtype) == jnp.dtype(jnp.bfloat16)
                 else jnp.float32)
    kernel = _make_kernel(HW, HW4, tq, mxu_dtype, exp_dtype)

    # ---- VMEM budget (double-buffered blocks + scratch + temporaries), clamped ----
    x_it = jnp.dtype(x_nchw.dtype).itemsize
    m_it = jnp.dtype(mxu_dtype).itemsize
    need = (2 * HW * C * x_it                        # x block (double-buffered)
            + 2 * tq * C * x_it                      # out block (double-buffered)
            + 2 * (2 * C * C8 + 2 * C * C2) * m_it   # weights (double-buffered)
            + HW4 * (C8 + C2) * m_it                 # pooled phi / g scratch
            + tq * HW4 * (8 + 2 * m_it)              # scores / p temporaries
            + 2 * HW4 * (C8 + C2) * 4                # prologue slab temporaries (f32)
            + (4 << 20))                             # headroom
    vmem_limit = int(min(max(need, 32 << 20), (vmem_cap * 7) // 8))

    out_perm = pl.pallas_call(
        kernel,
        out_shape=jax.ShapeDtypeStruct((B, HW, C), x_nchw.dtype),
        grid=(B, nq),
        in_specs=[
            pl.BlockSpec(memory_space=pltpu.SMEM),                    # gamma
            pl.BlockSpec((1, HW, C), lambda b, q: (b, 0, 0)),         # x (one DMA / batch)
            pl.BlockSpec((C, C8), lambda b, q: (0, 0)),               # W_theta^T
            pl.BlockSpec((C, C8), lambda b, q: (0, 0)),               # W_phi^T
            pl.BlockSpec((C, C2), lambda b, q: (0, 0)),               # W_g^T
            pl.BlockSpec((C2, C), lambda b, q: (0, 0)),               # W_o^T
        ],
        out_specs=pl.BlockSpec((1, tq, C), lambda b, q: (b, q, 0)),
        scratch_shapes=[
            pltpu.VMEM((HW4, C8), mxu_dtype),    # pooled phi (per batch)
            pltpu.VMEM((HW4, C2), mxu_dtype),    # pooled g   (per batch)
        ],
        compiler_params=pltpu.CompilerParams(
            dimension_semantics=("parallel", "arbitrary"),
            vmem_limit_bytes=vmem_limit,
        ),
    )(gamma_arr, x_perm, w_theta_t, w_phi_t, w_g_t, w_o_t)

    # back to NCHW (inverse of the input permutation)
    out6 = out_perm.reshape(B, 2, 2, H // 2, W // 2, C)               # (b,dy,dx,h2,w2,c)
    return jnp.transpose(out6, (0, 5, 3, 1, 4, 2)).reshape(B, C, H, W)


# ---------------- pure-JAX reference (mirrors the PyTorch forward) ----------------
def reference(x, w_theta, w_phi, w_g, w_o, gamma):
    B, C, H, W = x.shape

    def conv1x1(a, w):  # w: (out, in)
        return jnp.einsum('oc,bchw->bohw', w, a)

    def pool2x2(a):
        Bq, Cq, Hq, Wq = a.shape
        return a.reshape(Bq, Cq, Hq // 2, 2, Wq // 2, 2).max(axis=(3, 5))

    theta = conv1x1(x, w_theta).reshape(B, C // 8, H * W)
    phi = pool2x2(conv1x1(x, w_phi)).reshape(B, C // 8, H * W // 4)
    g = pool2x2(conv1x1(x, w_g)).reshape(B, C // 2, H * W // 4)
    beta = jax.nn.softmax(jnp.einsum('bct,bcs->bts', theta, phi), axis=-1)
    o_pre = jnp.einsum('bcs,bts->bct', g, beta).reshape(B, C // 2, H, W)
    o = conv1x1(o_pre, w_o)
    return gamma * o + x


if __name__ == "__main__":
    B, C, H, W = 2, 16, 16, 16
    C8, C2 = C // 8, C // 2

    key = jax.random.PRNGKey(0)
    kx, k1, k2, k3, k4 = jax.random.split(key, 5)
    x = jax.random.normal(kx, (B, C, H, W), jnp.float32)
    w_theta = jax.random.normal(k1, (C8, C), jnp.float32) * 0.1
    w_phi = jax.random.normal(k2, (C8, C), jnp.float32) * 0.1
    w_g = jax.random.normal(k3, (C2, C), jnp.float32) * 0.1
    w_o = jax.random.normal(k4, (C, C2), jnp.float32) * 0.1
    # Module __init__ sets gamma = 0.0 (output would trivially equal x); use a
    # deterministic non-zero value so the attention path is actually exercised.
    gamma = 0.5

    ref = reference(x, w_theta, w_phi, w_g, w_o, gamma)

    # f32 MXU path: tight check of the kernel structure / layout glue.
    out_f32 = self_attention_2d(x, w_theta, w_phi, w_g, w_o, gamma,
                                tq=64, mxu_dtype=jnp.float32)
    out_f32 = jax.block_until_ready(out_f32)
    assert out_f32.shape == (B, C, H, W)
    err_f32 = jnp.max(jnp.abs(out_f32 - ref))
    assert jnp.allclose(out_f32, ref, rtol=5e-3, atol=5e-3), f"f32 max abs err {err_f32}"

    # default bf16-MXU path (production config): looser tolerance (bf16 operands + bf16 exp).
    out_bf16 = self_attention_2d(x, w_theta, w_phi, w_g, w_o, gamma, tq=64)
    out_bf16 = jax.block_until_ready(out_bf16)
    assert out_bf16.shape == (B, C, H, W)
    err_bf16 = jnp.max(jnp.abs(out_bf16 - ref))
    assert jnp.allclose(out_bf16, ref, rtol=3e-2, atol=3e-2), f"bf16 max abs err {err_bf16}"

    print("KERNEL_OK")
</pallas_src>

<mosaic_0001>
module attributes {stable_mosaic.version = 11 : i64} {
  func.func @kernel(%arg0: i32, %arg1: i32, %arg2: memref<1xf32, #tpu.memory_space<smem>>, %arg3: memref<1x256x16xf32, #tpu.memory_space<vmem>>, %arg4: memref<16x2xf32, #tpu.memory_space<vmem>>, %arg5: memref<16x2xf32, #tpu.memory_space<vmem>>, %arg6: memref<16x8xf32, #tpu.memory_space<vmem>>, %arg7: memref<8x16xf32, #tpu.memory_space<vmem>>, %arg8: memref<1x64x16xf32, #tpu.memory_space<vmem>>, %arg9: memref<64x2xf32, #tpu.memory_space<vmem>>, %arg10: memref<64x8xf32, #tpu.memory_space<vmem>>) attributes {dimension_semantics = [#tpu.dimension_semantics<parallel>, #tpu.dimension_semantics<arbitrary>], iteration_bounds = array<i64: 2, 4>, scalar_prefetch = 0 : i64, scratch_operands = 2 : i64, tpu.core_type = #tpu.core_type<tc>, window_params = [{transform_indices = @transform_0, window_bounds = array<i64: 1>}, {transform_indices = @transform_1, window_bounds = array<i64: 1, 256, 16>}, {pipeline_mode = #tpu.pipeline_mode<synchronous>, transform_indices = @transform_2, window_bounds = array<i64: 16, 2>}, {pipeline_mode = #tpu.pipeline_mode<synchronous>, transform_indices = @transform_3, window_bounds = array<i64: 16, 2>}, {pipeline_mode = #tpu.pipeline_mode<synchronous>, transform_indices = @transform_4, window_bounds = array<i64: 16, 8>}, {pipeline_mode = #tpu.pipeline_mode<synchronous>, transform_indices = @transform_5, window_bounds = array<i64: 8, 16>}, {transform_indices = @transform_6, window_bounds = array<i64: 1, 64, 16>}]} {
    %c0_i32 = arith.constant 0 : i32
    %0 = arith.cmpi eq, %arg1, %c0_i32 : i32
    %1 = arith.extui %0 : i1 to i32
    %c0_i32_0 = arith.constant 0 : i32
    %2 = arith.cmpi ne, %1, %c0_i32_0 : i32
    scf.if %2 {
      %c0_19 = arith.constant 0 : index
      %c0_20 = arith.constant 0 : index
      %c0_21 = arith.constant 0 : index
      %33 = vector.load %arg3[%c0_19, %c0_20, %c0_21] : memref<1x256x16xf32, #tpu.memory_space<vmem>>, vector<1x64x16xf32>
      %34 = vector.shape_cast %33 : vector<1x64x16xf32> to vector<64x16xf32>
      %c0_22 = arith.constant 0 : index
      %c0_23 = arith.constant 0 : index
      %35 = vector.load %arg5[%c0_22, %c0_23] : memref<16x2xf32, #tpu.memory_space<vmem>>, vector<16x2xf32>
      %cst_24 = arith.constant dense<0.000000e+00> : vector<64x2xf32>
      %36 = tpu.matmul %34, %35, %cst_24 {dimension_numbers = #tpu.dot_dimension_numbers<[1], [0], [0], [1], [0, 0, 1, 1], [], []>} : vector<64x16xf32>, vector<16x2xf32>, vector<64x2xf32> -> vector<64x2xf32>
      %c0_25 = arith.constant 0 : index
      %c0_26 = arith.constant 0 : index
      %37 = vector.load %arg6[%c0_25, %c0_26] : memref<16x8xf32, #tpu.memory_space<vmem>>, vector<16x8xf32>
      %cst_27 = arith.constant dense<0.000000e+00> : vector<64x8xf32>
      %38 = tpu.matmul %34, %37, %cst_27 {dimension_numbers = #tpu.dot_dimension_numbers<[1], [0], [0], [1], [0, 0, 1, 1], [], []>} : vector<64x16xf32>, vector<16x8xf32>, vector<64x8xf32> -> vector<64x8xf32>
      %c0_28 = arith.constant 0 : index
      %c64 = arith.constant 64 : index
      %c0_29 = arith.constant 0 : index
      %39 = vector.load %arg3[%c0_28, %c64, %c0_29] : memref<1x256x16xf32, #tpu.memory_space<vmem>>, vector<1x64x16xf32>
      %40 = vector.shape_cast %39 : vector<1x64x16xf32> to vector<64x16xf32>
      %c0_30 = arith.constant 0 : index
      %c0_31 = arith.constant 0 : index
      %41 = vector.load %arg5[%c0_30, %c0_31] : memref<16x2xf32, #tpu.memory_space<vmem>>, vector<16x2xf32>
      %cst_32 = arith.constant dense<0.000000e+00> : vector<64x2xf32>
      %42 = tpu.matmul %40, %41, %cst_32 {dimension_numbers = #tpu.dot_dimension_numbers<[1], [0], [0], [1], [0, 0, 1, 1], [], []>} : vector<64x16xf32>, vector<16x2xf32>, vector<64x2xf32> -> vector<64x2xf32>
      %c0_33 = arith.constant 0 : index
      %c0_34 = arith.constant 0 : index
      %43 = vector.load %arg6[%c0_33, %c0_34] : memref<16x8xf32, #tpu.memory_space<vmem>>, vector<16x8xf32>
      %cst_35 = arith.constant dense<0.000000e+00> : vector<64x8xf32>
      %44 = tpu.matmul %40, %43, %cst_35 {dimension_numbers = #tpu.dot_dimension_numbers<[1], [0], [0], [1], [0, 0, 1, 1], [], []>} : vector<64x16xf32>, vector<16x8xf32>, vector<64x8xf32> -> vector<64x8xf32>
      %45 = arith.maximumf %36, %42 : vector<64x2xf32>
      %46 = arith.maximumf %38, %44 : vector<64x8xf32>
      %c0_36 = arith.constant 0 : index
      %c128 = arith.constant 128 : index
      %c0_37 = arith.constant 0 : index
      %47 = vector.load %arg3[%c0_36, %c128, %c0_37] : memref<1x256x16xf32, #tpu.memory_space<vmem>>, vector<1x64x16xf32>
      %48 = vector.shape_cast %47 : vector<1x64x16xf32> to vector<64x16xf32>
      %c0_38 = arith.constant 0 : index
      %c0_39 = arith.constant 0 : index
      %49 = vector.load %arg5[%c0_38, %c0_39] : memref<16x2xf32, #tpu.memory_space<vmem>>, vector<16x2xf32>
      %cst_40 = arith.constant dense<0.000000e+00> : vector<64x2xf32>
      %50 = tpu.matmul %48, %49, %cst_40 {dimension_numbers = #tpu.dot_dimension_numbers<[1], [0], [0], [1], [0, 0, 1, 1], [], []>} : vector<64x16xf32>, vector<16x2xf32>, vector<64x2xf32> -> vector<64x2xf32>
      %c0_41 = arith.constant 0 : index
      %c0_42 = arith.constant 0 : index
      %51 = vector.load %arg6[%c0_41, %c0_42] : memref<16x8xf32, #tpu.memory_space<vmem>>, vector<16x8xf32>
      %cst_43 = arith.constant dense<0.000000e+00> : vector<64x8xf32>
      %52 = tpu.matmul %48, %51, %cst_43 {dimension_numbers = #tpu.dot_dimension_numbers<[1], [0], [0], [1], [0, 0, 1, 1], [], []>} : vector<64x16xf32>, vector<16x8xf32>, vector<64x8xf32> -> vector<64x8xf32>
      %53 = arith.maximumf %45, %50 : vector<64x2xf32>
      %54 = arith.maximumf %46, %52 : vector<64x8xf32>
      %c0_44 = arith.constant 0 : index
      %c192 = arith.constant 192 : index
      %c0_45 = arith.constant 0 : index
      %55 = vector.load %arg3[%c0_44, %c192, %c0_45] : memref<1x256x16xf32, #tpu.memory_space<vmem>>, vector<1x64x16xf32>
      %56 = vector.shape_cast %55 : vector<1x64x16xf32> to vector<64x16xf32>
      %c0_46 = arith.constant 0 : index
      %c0_47 = arith.constant 0 : index
      %57 = vector.load %arg5[%c0_46, %c0_47] : memref<16x2xf32, #tpu.memory_space<vmem>>, vector<16x2xf32>
      %cst_48 = arith.constant dense<0.000000e+00> : vector<64x2xf32>
      %58 = tpu.matmul %56, %57, %cst_48 {dimension_numbers = #tpu.dot_dimension_numbers<[1], [0], [0], [1], [0, 0, 1, 1], [], []>} : vector<64x16xf32>, vector<16x2xf32>, vector<64x2xf32> -> vector<64x2xf32>
      %c0_49 = arith.constant 0 : index
      %c0_50 = arith.constant 0 : index
      %59 = vector.load %arg6[%c0_49, %c0_50] : memref<16x8xf32, #tpu.memory_space<vmem>>, vector<16x8xf32>
      %cst_51 = arith.constant dense<0.000000e+00> : vector<64x8xf32>
      %60 = tpu.matmul %56, %59, %cst_51 {dimension_numbers = #tpu.dot_dimension_numbers<[1], [0], [0], [1], [0, 0, 1, 1], [], []>} : vector<64x16xf32>, vector<16x8xf32>, vector<64x8xf32> -> vector<64x8xf32>
      %61 = arith.maximumf %53, %58 : vector<64x2xf32>
      %62 = arith.maximumf %54, %60 : vector<64x8xf32>
      %c0_52 = arith.constant 0 : index
      %c0_53 = arith.constant 0 : index
      %63 = vector.load %arg9[%c0_52, %c0_53] : memref<64x2xf32, #tpu.memory_space<vmem>>, vector<64x2xf32>
      tpu.vector_store %arg9[%c0_52, %c0_53], %61 {strides = array<i32>} : memref<64x2xf32, #tpu.memory_space<vmem>>, vector<64x2xf32>,
      %c0_54 = arith.constant 0 : index
      %c0_55 = arith.constant 0 : index
      %64 = vector.load %arg10[%c0_54, %c0_55] : memref<64x8xf32, #tpu.memory_space<vmem>>, vector<64x8xf32>
      tpu.vector_store %arg10[%c0_54, %c0_55], %62 {strides = array<i32>} : memref<64x8xf32, #tpu.memory_space<vmem>>, vector<64x8xf32>,
    } else {
    }
    %c64_i32 = arith.constant 64 : i32
    %3 = arith.muli %arg1, %c64_i32 : i32
    %4 = tpu.assume_multiple %3, 64 : i32
    %c0 = arith.constant 0 : index
    %5 = arith.index_cast %4 : i32 to index
    %c0_1 = arith.constant 0 : index
    %6 = vector.load %arg3[%c0, %5, %c0_1] : memref<1x256x16xf32, #tpu.memory_space<vmem>>, vector<1x64x16xf32>
    %7 = vector.shape_cast %6 : vector<1x64x16xf32> to vector<64x16xf32>
    %c0_2 = arith.constant 0 : index
    %c0_3 = arith.constant 0 : index
    %8 = vector.load %arg4[%c0_2, %c0_3] : memref<16x2xf32, #tpu.memory_space<vmem>>, vector<16x2xf32>
    %cst = arith.constant dense<0.000000e+00> : vector<64x2xf32>
    %9 = tpu.matmul %7, %8, %cst {dimension_numbers = #tpu.dot_dimension_numbers<[1], [0], [0], [1], [0, 0, 1, 1], [], []>} : vector<64x16xf32>, vector<16x2xf32>, vector<64x2xf32> -> vector<64x2xf32>
    %c0_4 = arith.constant 0 : index
    %c0_5 = arith.constant 0 : index
    %10 = vector.load %arg9[%c0_4, %c0_5] : memref<64x2xf32, #tpu.memory_space<vmem>>, vector<64x2xf32>
    %cst_6 = arith.constant dense<0.000000e+00> : vector<64x64xf32>
    %11 = tpu.matmul %9, %10, %cst_6 {dimension_numbers = #tpu.dot_dimension_numbers<[1], [1], [0], [0], [0, 0, 1, 0], [], []>} : vector<64x2xf32>, vector<64x2xf32>, vector<64x64xf32> -> vector<64x64xf32>
    %cst_7 = arith.constant dense<0xFF800000> : vector<64xf32>
    %12 = vector.multi_reduction <maximumf>, %11, %cst_7 [1] : vector<64x64xf32> to vector<64xf32>
    %13 = vector.shape_cast %12 : vector<64xf32> to vector<64x1xf32>
    %14 = vector.broadcast %13 : vector<64x1xf32> to vector<64x64xf32>
    %15 = arith.subf %11, %14 : vector<64x64xf32>
    %16 = math.exp %15 : vector<64x64xf32>
    %cst_8 = arith.constant dense<0.000000e+00> : vector<64xf32>
    %17 = vector.multi_reduction <add>, %16, %cst_8 [1] : vector<64x64xf32> to vector<64xf32>
    %18 = vector.shape_cast %17 : vector<64xf32> to vector<64x1xf32>
    %c0_9 = arith.constant 0 : index
    %c0_10 = arith.constant 0 : index
    %19 = vector.load %arg10[%c0_9, %c0_10] : memref<64x8xf32, #tpu.memory_space<vmem>>, vector<64x8xf32>
    %cst_11 = arith.constant dense<0.000000e+00> : vector<64x8xf32>
    %20 = tpu.matmul %16, %19, %cst_11 {dimension_numbers = #tpu.dot_dimension_numbers<[1], [0], [0], [1], [0, 0, 1, 1], [], []>} : vector<64x64xf32>, vector<64x8xf32>, vector<64x8xf32> -> vector<64x8xf32>
    %21 = tpu.reciprocal %18 {approx = true} : vector<64x1xf32> -> vector<64x1xf32>
    %22 = vector.broadcast %21 : vector<64x1xf32> to vector<64x8xf32>
    %23 = arith.mulf %20, %22 : vector<64x8xf32>
    %c0_12 = arith.constant 0 : index
    %c0_13 = arith.constant 0 : index
    %24 = vector.load %arg7[%c0_12, %c0_13] : memref<8x16xf32, #tpu.memory_space<vmem>>, vector<8x16xf32>
    %cst_14 = arith.constant dense<0.000000e+00> : vector<64x16xf32>
    %25 = tpu.matmul %23, %24, %cst_14 {dimension_numbers = #tpu.dot_dimension_numbers<[1], [0], [0], [1], [0, 0, 1, 1], [], []>} : vector<64x8xf32>, vector<8x16xf32>, vector<64x16xf32> -> vector<64x16xf32>
    %c0_15 = arith.constant 0 : index
    %26 = memref.load %arg2[%c0_15] : memref<1xf32, #tpu.memory_space<smem>>
    %27 = vector.broadcast %26 : f32 to vector<64x16xf32>
    %28 = arith.mulf %27, %25 : vector<64x16xf32>
    %29 = arith.addf %28, %7 : vector<64x16xf32>
    %c0_16 = arith.constant 0 : index
    %c0_17 = arith.constant 0 : index
    %c0_18 = arith.constant 0 : index
    %30 = vector.load %arg8[%c0_16, %c0_17, %c0_18] : memref<1x64x16xf32, #tpu.memory_space<vmem>>, vector<1x64x16xf32>
    %31 = vector.shape_cast %30 : vector<1x64x16xf32> to vector<64x16xf32>
    %32 = vector.shape_cast %29 : vector<64x16xf32> to vector<1x64x16xf32>
    tpu.vector_store %arg8[%c0_16, %c0_17, %c0_18], %32 {strides = array<i32>} : memref<1x64x16xf32, #tpu.memory_space<vmem>>, vector<1x64x16xf32>,
    return
  }
  func.func @transform_0(%arg0: i32, %arg1: i32) -> i32 {
    %c0_i32 = arith.constant 0 : i32
    %c0_i32_0 = arith.constant 0 : i32
    return %c0_i32 : i32
  }
  func.func @transform_1(%arg0: i32, %arg1: i32) -> (i32, i32, i32) {
    %c0_i32 = arith.constant 0 : i32
    %c0_i32_0 = arith.constant 0 : i32
    %c0_i32_1 = arith.constant 0 : i32
    return %arg0, %c0_i32, %c0_i32_0 : i32, i32, i32
  }
  func.func @transform_2(%arg0: i32, %arg1: i32) -> (i32, i32) {
    %c0_i32 = arith.constant 0 : i32
    %c0_i32_0 = arith.constant 0 : i32
    %c0_i32_1 = arith.constant 0 : i32
    return %c0_i32, %c0_i32_0 : i32, i32
  }
  func.func @transform_3(%arg0: i32, %arg1: i32) -> (i32, i32) {
    %c0_i32 = arith.constant 0 : i32
    %c0_i32_0 = arith.constant 0 : i32
    %c0_i32_1 = arith.constant 0 : i32
    return %c0_i32, %c0_i32_0 : i32, i32
  }
  func.func @transform_4(%arg0: i32, %arg1: i32) -> (i32, i32) {
    %c0_i32 = arith.constant 0 : i32
    %c0_i32_0 = arith.constant 0 : i32
    %c0_i32_1 = arith.constant 0 : i32
    return %c0_i32, %c0_i32_0 : i32, i32
  }
  func.func @transform_5(%arg0: i32, %arg1: i32) -> (i32, i32) {
    %c0_i32 = arith.constant 0 : i32
    %c0_i32_0 = arith.constant 0 : i32
    %c0_i32_1 = arith.constant 0 : i32
    return %c0_i32, %c0_i32_0 : i32, i32
  }
  func.func @transform_6(%arg0: i32, %arg1: i32) -> (i32, i32, i32) {
    %c0_i32 = arith.constant 0 : i32
    %c0_i32_0 = arith.constant 0 : i32
    return %arg0, %arg1, %c0_i32 : i32, i32, i32
  }
}

</mosaic_0001>

<llo_original>
// kernel: tpu_custom_call.1
$region0: #{tpu_custom_call.1}
  #allocation0 [shape = 'u32[]', space=smem, size = 0x4, offset = 0x4, fixed_abs, tag = 'smem constant byte address 0x4 - core index']
  #allocation1 [shape = 'u32[144,128]{1,0:T(1,128)}', space=vmem, size = 0x12000, scoped, tag = 'internal scratch']
  #allocation2 [shape = 'f32[64,2]{1,0:T(8,128)}', space=vmem, size = 0x8000, scoped, tag = 'scratch operand']
  #allocation3 [shape = 'f32[64,8]{1,0:T(8,128)}', space=vmem, size = 0x8000, scoped, tag = 'scratch operand']
  #allocation4 [shape = 'f32[1]{0:T(128)S(6)}', space=smem, size = 0x200, scoped, tag = 'scoped memory for tpu_custom_call.1']
  %s0 = inlined_call_operand.<no memory space> [shape: f32[1], index: 0, kind: input, shape index: {}]
  %s1 = inlined_call_operand.vmem [shape: f32[2,256,16], index: 1, kind: input, shape index: {}]
  %s2 = inlined_call_operand.vmem [shape: f32[16,2], index: 2, kind: input, shape index: {}]
  %s3 = inlined_call_operand.vmem [shape: f32[16,2], index: 3, kind: input, shape index: {}]
  %s4 = inlined_call_operand.vmem [shape: f32[16,8], index: 4, kind: input, shape index: {}]
  %s5 = inlined_call_operand.vmem [shape: f32[8,16], index: 5, kind: input, shape index: {}]
  %s6 = inlined_call_operand.vmem [shape: f32[2,256,16], index: 6, kind: output, shape index: {}]
  %s7 = sld [smem:[#allocation0]]
  $region61: #{tpu_custom_call.1} parent=0
    _
  %s9 = ssub.s32 1, %s7
  %s10 = scalar_select 0, %s9, %s7
  %11 = sst [smem:[#allocation4]] %s0
  loop: start=0, step=1, limit=10
  $region2: #{tpu_custom_call.1} parent=0 // loop_pre_header
    _
  $region3: #{tpu_custom_call.1} parent=0 // loop_header
    %s13 = sphi 0, %s17
    %p14 = scmp.ge.s32.totalorder %s13, 10
    %s20 = sphi 0, %s32
    %s21 = sphi 0, %s28
    %s22 = sphi 0, %s20
    %s23 = sphi 0, %s21
    %s24 = sphi 0, %s22
    %s25 = sphi 0, %s23
    %s33 = sphi 0, %s33
    %s35 = sphi 0, %s33
    %s36 = sphi 0, %s35
    %s50 = sphi 0, %s36
    %s56 = sphi 0, %s58
    %s59 = sphi 0, %s56
    %s60 = sphi 0, %s59
    %s76 = sphi 0, %s60
    %s80 = sphi 0, %s80
    %s82 = sphi 0, %s80
    %s83 = sphi 0, %s82
    %s97 = sphi 0, %s83
    %s101 = sphi 0, %s101
    %s103 = sphi 0, %s101
    %s104 = sphi 0, %s103
    %s118 = sphi 0, %s104
    %s122 = sphi 0, %s122
    %s124 = sphi 0, %s122
    %s125 = sphi 0, %s124
    %s139 = sphi 0, %s125
    %s143 = sphi 0, %s143
    %s145 = sphi 0, %s143
    %s146 = sphi 0, %s145
    %s160 = sphi 0, %s146
    %s168 = sphi 0, %s170
    %s171 = sphi 0, %s168
    %s172 = sphi 0, %s171
    %s188 = sphi 0, %s172
  $region4: #{tpu_custom_call.1} parent=0 // loop_header_branch
    %16 = sbr.rel (%p14) target = $region8
  $region5: #{tpu_custom_call.1} parent=0 // loop_body
    %s18 = ssub.s32 %s13, 1
    %s19 = ssub.s32 %s13, 2
    %s26 = sadd.s32 1, %s21
    %p27 = scmp.ge.s32.totalorder %s26, 4
    %s28 = scalar_select %p27, 0, %s26
    %s29 = sadd.s32 1, %s20
    %s30 = scalar_select %p27, %s29, %s20
    %p31 = scmp.ge.s32.totalorder %s30, 2
    %s32 = scalar_select %p31, 0, %s30
    %s34 = sadd.s32 %s33, 1
    %p37 = scmp.eq.s32.totalorder %s13, 7
    %p38 = scmp.ne.s32.totalorder %s33, %s35
    %p39 = scmp.eq.s32.totalorder %s13, 0
    %p40 = por %p38, %p39
    %p41 = scmp.ne.s32.totalorder %s33, %s35
    %p42 = scmp.eq.s32.totalorder %s18, 7
    %p43 = por %p41, %p42
    %p44 = scmp.ne.s32.totalorder %s35, %s36
    %p45 = scmp.eq.s32.totalorder %s18, 0
    %p46 = por %p44, %p45
    %p47 = scmp.ne.s32.totalorder %s35, %s36
    %p48 = scmp.eq.s32.totalorder %s19, 7
    %p49 = por %p47, %p48
    %p51 = scmp.ne.s32.totalorder %s36, %s50
    %p52 = scmp.eq.s32.totalorder %s19, 0
    %p53 = por %p51, %p52
    %s54 = ssub.s32 %s20, %s32
    %p55 = scmp.eq.s32.totalorder %s54, 0
    %s57 = sadd.s32 %s56, 1
    %s58 = scalar_select %p55, %s56, %s57
    %p61 = pneg %p55
    %p62 = scmp.eq.s32.totalorder %s13, 7
    %p63 = por %p61, %p62
    %p64 = scmp.ne.s32.totalorder %s56, %s59
    %p65 = scmp.eq.s32.totalorder %s13, 0
    %p66 = por %p64, %p65
    %p67 = scmp.ne.s32.totalorder %s56, %s59
    %p68 = scmp.eq.s32.totalorder %s18, 7
    %p69 = por %p67, %p68
    %p70 = scmp.ne.s32.totalorder %s59, %s60
    %p71 = scmp.eq.s32.totalorder %s18, 0
    %p72 = por %p70, %p71
    %p73 = scmp.ne.s32.totalorder %s59, %s60
    %p74 = scmp.eq.s32.totalorder %s19, 7
    %p75 = por %p73, %p74
    %p77 = scmp.ne.s32.totalorder %s60, %s76
    %p78 = scmp.eq.s32.totalorder %s19, 0
    %p79 = por %p77, %p78
    %s81 = sadd.s32 %s80, 1
    %p84 = scmp.eq.s32.totalorder %s13, 7
    %p85 = scmp.ne.s32.totalorder %s80, %s82
    %p86 = scmp.eq.s32.totalorder %s13, 0
    %p87 = por %p85, %p86
    %p88 = scmp.ne.s32.totalorder %s80, %s82
    %p89 = scmp.eq.s32.totalorder %s18, 7
    %p90 = por %p88, %p89
    %p91 = scmp.ne.s32.totalorder %s82, %s83
    %p92 = scmp.eq.s32.totalorder %s18, 0
    %p93 = por %p91, %p92
    %p94 = scmp.ne.s32.totalorder %s82, %s83
    %p95 = scmp.eq.s32.totalorder %s19, 7
    %p96 = por %p94, %p95
    %p98 = scmp.ne.s32.totalorder %s83, %s97
    %p99 = scmp.eq.s32.totalorder %s19, 0
    %p100 = por %p98, %p99
    %s102 = sadd.s32 %s101, 1
    %p105 = scmp.eq.s32.totalorder %s13, 7
    %p106 = scmp.ne.s32.totalorder %s101, %s103
    %p107 = scmp.eq.s32.totalorder %s13, 0
    %p108 = por %p106, %p107
    %p109 = scmp.ne.s32.totalorder %s101, %s103
    %p110 = scmp.eq.s32.totalorder %s18, 7
    %p111 = por %p109, %p110
    %p112 = scmp.ne.s32.totalorder %s103, %s104
    %p113 = scmp.eq.s32.totalorder %s18, 0
    %p114 = por %p112, %p113
    %p115 = scmp.ne.s32.totalorder %s103, %s104
    %p116 = scmp.eq.s32.totalorder %s19, 7
    %p117 = por %p115, %p116
    %p119 = scmp.ne.s32.totalorder %s104, %s118
    %p120 = scmp.eq.s32.totalorder %s19, 0
    %p121 = por %p119, %p120
    %s123 = sadd.s32 %s122, 1
    %p126 = scmp.eq.s32.totalorder %s13, 7
    %p127 = scmp.ne.s32.totalorder %s122, %s124
    %p128 = scmp.eq.s32.totalorder %s13, 0
    %p129 = por %p127, %p128
    %p130 = scmp.ne.s32.totalorder %s122, %s124
    %p131 = scmp.eq.s32.totalorder %s18, 7
    %p132 = por %p130, %p131
    %p133 = scmp.ne.s32.totalorder %s124, %s125
    %p134 = scmp.eq.s32.totalorder %s18, 0
    %p135 = por %p133, %p134
    %p136 = scmp.ne.s32.totalorder %s124, %s125
    %p137 = scmp.eq.s32.totalorder %s19, 7
    %p138 = por %p136, %p137
    %p140 = scmp.ne.s32.totalorder %s125, %s139
    %p141 = scmp.eq.s32.totalorder %s19, 0
    %p142 = por %p140, %p141
    %s144 = sadd.s32 %s143, 1
    %p147 = scmp.eq.s32.totalorder %s13, 7
    %p148 = scmp.ne.s32.totalorder %s143, %s145
    %p149 = scmp.eq.s32.totalorder %s13, 0
    %p150 = por %p148, %p149
    %p151 = scmp.ne.s32.totalorder %s143, %s145
    %p152 = scmp.eq.s32.totalorder %s18, 7
    %p153 = por %p151, %p152
    %p154 = scmp.ne.s32.totalorder %s145, %s146
    %p155 = scmp.eq.s32.totalorder %s18, 0
    %p156 = por %p154, %p155
    %p157 = scmp.ne.s32.totalorder %s145, %s146
    %p158 = scmp.eq.s32.totalorder %s19, 7
    %p159 = por %p157, %p158
    %p161 = scmp.ne.s32.totalorder %s146, %s160
    %p162 = scmp.eq.s32.totalorder %s19, 0
    %p163 = por %p161, %p162
    %s164 = ssub.s32 %s20, %s32
    %s165 = ssub.s32 %s21, %s28
    %s166 = sor.u32 %s164, %s165
    %p167 = scmp.eq.s32.totalorder %s166, 0
    %s169 = sadd.s32 %s168, 1
    %s170 = scalar_select %p167, %s168, %s169
    %p173 = pneg %p167
    %p174 = scmp.eq.s32.totalorder %s13, 7
    %p175 = por %p173, %p174
    %p176 = scmp.ne.s32.totalorder %s168, %s171
    %p177 = scmp.eq.s32.totalorder %s13, 0
    %p178 = por %p176, %p177
    %p179 = scmp.ne.s32.totalorder %s168, %s171
    %p180 = scmp.eq.s32.totalorder %s18, 7
    %p181 = por %p179, %p180
    %p182 = scmp.ne.s32.totalorder %s171, %s172
    %p183 = scmp.eq.s32.totalorder %s18, 0
    %p184 = por %p182, %p183
    %p185 = scmp.ne.s32.totalorder %s171, %s172
    %p186 = scmp.eq.s32.totalorder %s19, 7
    %p187 = por %p185, %p186
    %p189 = scmp.ne.s32.totalorder %s172, %s188
    %p190 = scmp.eq.s32.totalorder %s19, 0
    %p191 = por %p189, %p190
    %p192 = scmp.le.s32.totalorder 1, %s13
    %p193 = scmp.lt.s32.totalorder %s13, 9
    %p194 = pnand %p192, %p193
    %p195 = pneg %p194
    // Predicated region
    $region9: #{tpu_custom_call.1} parent=5 // pred_check
      _
    $region10: #{tpu_custom_call.1} parent=5 // pred_check_branch
      %197 = sbr.rel (%p194) target = $region12
    $region11: #{tpu_custom_call.1} parent=5 // pred_region
      %s198 = ssub.s32 %s13, 1
      // Predicated region
      $region13: #{tpu_custom_call.1} parent=11 // pred_check
        %p199 = pneg %p46
      $region14: #{tpu_custom_call.1} parent=11 // pred_check_branch
        %201 = sbr.rel (%p199) target = $region16
      $region15: #{tpu_custom_call.1} parent=11 // pred_region
        _
      $region16: #{tpu_custom_call.1} parent=11 // pred_fallthru
        _
      // Predicated region
      $region17: #{tpu_custom_call.1} parent=11 // pred_check
        %p202 = pneg %p93
      $region18: #{tpu_custom_call.1} parent=11 // pred_check_branch
        %204 = sbr.rel (%p202) target = $region20
      $region19: #{tpu_custom_call.1} parent=11 // pred_region
        _
      $region20: #{tpu_custom_call.1} parent=11 // pred_fallthru
        _
      // Predicated region
      $region21: #{tpu_custom_call.1} parent=11 // pred_check
        %p205 = pneg %p114
      $region22: #{tpu_custom_call.1} parent=11 // pred_check_branch
        %207 = sbr.rel (%p205) target = $region24
      $region23: #{tpu_custom_call.1} parent=11 // pred_region
        _
      $region24: #{tpu_custom_call.1} parent=11 // pred_fallthru
        _
      // Predicated region
      $region25: #{tpu_custom_call.1} parent=11 // pred_check
        %p208 = pneg %p135
      $region26: #{tpu_custom_call.1} parent=11 // pred_check_branch
        %210 = sbr.rel (%p208) target = $region28
      $region27: #{tpu_custom_call.1} parent=11 // pred_region
        _
      $region28: #{tpu_custom_call.1} parent=11 // pred_fallthru
        _
      // Predicated region
      $region29: #{tpu_custom_call.1} parent=11 // pred_check
        %p211 = pneg %p156
      $region30: #{tpu_custom_call.1} parent=11 // pred_check_branch
        %213 = sbr.rel (%p211) target = $region32
      $region31: #{tpu_custom_call.1} parent=11 // pred_region
        _
      $region32: #{tpu_custom_call.1} parent=11 // pred_fallthru
        _
    $region12: #{tpu_custom_call.1} parent=5 // pred_fallthru
      _
    %p214 = scmp.lt.s32.totalorder %s13, 8
    // Predicated region
    $region33: #{tpu_custom_call.1} parent=5 // pred_check
      %p215 = pneg %p214
    $region34: #{tpu_custom_call.1} parent=5 // pred_check_branch
      %217 = sbr.rel (%p215) target = $region36
    $region35: #{tpu_custom_call.1} parent=5 // pred_region
      // Predicated region
      $region37: #{tpu_custom_call.1} parent=35 // pred_check
        %p218 = pneg %p66
      $region38: #{tpu_custom_call.1} parent=35 // pred_check_branch
        %220 = sbr.rel (%p218) target = $region40
      $region39: #{tpu_custom_call.1} parent=35 // pred_region
        %p221 = scmp.lt.s32.totalorder %s20, 1
        %s222 = scalar_select %p221, %s20, 1
        %s223 = smul.addr %s222, 32
        %s224 = smul.addr %s223, 8
        %s225 = scalar_lea.vmem %s1, %s224
      $region40: #{tpu_custom_call.1} parent=35 // pred_fallthru
        _
    $region36: #{tpu_custom_call.1} parent=5 // pred_fallthru
      _
    %p226 = scmp.le.s32.totalorder 1, %s13
    %p227 = scmp.lt.s32.totalorder %s13, 9
    %p228 = pnand %p226, %p227
    %p229 = pneg %p228
    // Predicated region
    $region41: #{tpu_custom_call.1} parent=5 // pred_check
      _
    $region42: #{tpu_custom_call.1} parent=5 // pred_check_branch
      %231 = sbr.rel (%p228) target = $region44
    $region43: #{tpu_custom_call.1} parent=5 // pred_region
      %s232 = ssub.s32 %s13, 1
      %p233 = pneg %p46
      %p234 = pneg %p43
      %p235 = scmp.lt.s32.totalorder %s22, 1
      %s236 = scalar_select %p235, %s22, 1
      %s237 = smul.addr %s236, 32
      %s238 = smul.addr %s237, 8
      %s239 = scalar_lea.vmem %s1, %s238
      %p240 = pneg %p72
      %p241 = pneg %p69
      %p242 = pneg %p93
      %p243 = pneg %p90
      %p244 = pneg %p114
      %p245 = pneg %p111
      %p246 = pneg %p135
      %p247 = pneg %p132
      %p248 = pneg %p156
      %p249 = pneg %p153
      %p250 = pneg %p184
      %p251 = pneg %p181
      %s252 = smul.u32 8, %s23
      %p253 = scmp.lt.s32.totalorder %s22, 1
      %s254 = scalar_select %p253, %s22, 1
      %p255 = scmp.lt.s32.totalorder %s252, 31
      %s256 = scalar_select %p255, %s252, 31
      %s257 = smul.addr %s254, 32
      %s258 = sadd.s32 %s256, %s257
      %s259 = smul.addr %s258, 8
      %s260 = scalar_lea.vmem %s6, %s259
      %p261 = scmp.lt.s32.totalorder %s22, 1
      %s262 = scalar_select %p261, %s22, 1
      %s263 = smul.addr %s262, 32
      %s264 = smul.addr %s263, 8
      %s265 = scalar_lea.vmem %s1, %s264
      %s266 = smul.u32 8, %s23
      %p267 = scmp.lt.s32.totalorder %s22, 1
      %s268 = scalar_select %p267, %s22, 1
      %p269 = scmp.lt.s32.totalorder %s266, 31
      %s270 = scalar_select %p269, %s266, 31
      %s271 = smul.addr %s268, 32
      %s272 = sadd.s32 %s270, %s271
      %s273 = smul.addr %s272, 8
      %s274 = scalar_lea.vmem %s6, %s273
      %s275 = smul.u32 8, %s23
      %p276 = scmp.eq.s32.totalorder %s23, 0
      // Predicated region
      $region45: #{tpu_custom_call.1} parent=43 // pred_check
        %p277 = pneg %p276
      $region46: #{tpu_custom_call.1} parent=43 // pred_check_branch
        %279 = sbr.rel (%p277) target = $region48
      $region47: #{tpu_custom_call.1} parent=43 // pred_region
        %v280 = vld [vmem:[%s265] sm:$0xff]
        %v281 = vld [vmem:[%s265 + $0x8] sm:$0xff]
        %v282 = vld [vmem:[%s265 + $0x10] sm:$0xff]
        %v283 = vld [vmem:[%s265 + $0x18] sm:$0xff]
        %v284 = vld [vmem:[%s265 + $0x20] sm:$0xff]
        %v285 = vld [vmem:[%s265 + $0x28] sm:$0xff]
        %v286 = vld [vmem:[%s265 + $0x30] sm:$0xff]
        %v287 = vld [vmem:[%s265 + $0x38] sm:$0xff]
        %v288 = vld [vmem:[%s3] sm:$0xff]
        %v289 = vld [vmem:[%s3 + $0x8] sm:$0xff]
        %vm290 = vcmask 130048
        %v292 = vsel %vm290, %v280, 0
        %v295 = vsel %vm290, %v281, 0
        %v298 = vsel %vm290, %v282, 0
        %v301 = vsel %vm290, %v283, 0
        %v304 = vsel %vm290, %v284, 0
        %v307 = vsel %vm290, %v285, 0
        %v310 = vsel %vm290, %v286, 0
        %v313 = vsel %vm290, %v287, 0
        %315 = vmatprep.subr.mxu0 0.0
        %316 = vmatpush1.msra.mxu0 %v288
        %317 = vmatprep.subr.mxu0 0.0
        %318 = vmatpush1.msra.mxu0 %v289
        %319 = vmatprep.subr.mxu0 0.0
        %320 = vmatpush1.msra.mxu0 0.0
        %321 = vmatprep.subr.mxu0 0.0
        %322 = vmatpush1.msra.mxu0 0.0
        %323 = vmatprep.subr.mxu0 0.0
        %324 = vmatpush1.msra.mxu0 0.0
        %325 = vmatprep.subr.mxu0 0.0
        %326 = vmatpush1.msra.mxu0 0.0
        %327 = vmatprep.subr.mxu0 0.0
        %328 = vmatpush1.msra.mxu0 0.0
        %329 = vmatprep.subr.mxu0 0.0
        %330 = vmatpush1.msra.mxu0 0.0
        %331 = vmatprep.subr.mxu0 0.0
        %332 = vmatpush1.msra.mxu0 0.0
        %333 = vmatprep.subr.mxu0 0.0
        %334 = vmatpush1.msra.mxu0 0.0
        %335 = vmatprep.subr.mxu0 0.0
        %336 = vmatpush1.msra.mxu0 0.0
        %337 = vmatprep.subr.mxu0 0.0
        %338 = vmatpush1.msra.mxu0 0.0
        %339 = vmatprep.subr.mxu0 0.0
        %340 = vmatpush1.msra.mxu0 0.0
        %341 = vmatprep.subr.mxu0 0.0
        %342 = vmatpush1.msra.mxu0 0.0
        %343 = vmatprep.subr.mxu0 0.0
        %344 = vmatpush1.msra.mxu0 0.0
        %345 = vmatprep.subr.mxu0 0.0
        %346 = vmatpush1.msra.mxu0 0.0
        %347 = vmatprep.subr.mxu0 0.0
        %348 = vmatpush1.msra.mxu0 0.0
        %349 = vmatprep.subr.mxu0 0.0
        %350 = vmatpush1.msra.mxu0 0.0
        %351 = vmatprep.subr.mxu0 0.0
        %352 = vmatpush1.msra.mxu0 0.0
        %353 = vmatprep.subr.mxu0 0.0
        %354 = vmatpush1.msra.mxu0 0.0
        %355 = vmatprep.subr.mxu0 0.0
        %356 = vmatpush1.msra.mxu0 0.0
        %357 = vmatprep.subr.mxu0 0.0
        %358 = vmatpush1.msra.mxu0 0.0
        %359 = vmatprep.subr.mxu0 0.0
        %360 = vmatpush1.msra.mxu0 0.0
        %361 = vmatprep.subr.mxu0 0.0
        %362 = vmatpush1.msra.mxu0 0.0
        %363 = vmatprep.subr.mxu0 0.0
        %364 = vmatpush1.msra.mxu0 0.0
        %365 = vmatprep.subr.mxu0 0.0
        %366 = vmatpush1.msra.mxu0 0.0
        %367 = vmatprep.subr.mxu0 0.0
        %368 = vmatpush1.msra.mxu0 0.0
        %369 = vmatprep.subr.mxu0 0.0
        %370 = vmatpush1.msra.mxu0 0.0
        %371 = vmatprep.subr.mxu0 0.0
        %372 = vmatpush1.msra.mxu0 0.0
        %373 = vmatprep.subr.mxu0 0.0
        %374 = vmatpush1.msra.mxu0 0.0
        %375 = vmatprep.subr.mxu0 0.0
        %376 = vmatpush1.msra.mxu0 0.0
        %377 = vmatprep.subr.mxu0 0.0
        %378 = vmatpush1.msra.mxu0 0.0
        %379 = vmatprep.mubr.f32.mxu0 0.0
        %380 = vmatmul.mubr.f32.gmra.mrb[0].mxu0 %v292
        %v381 = vpop.f32.mrb[0].mxu0
        %v382 = vadd.f32 0.0, %v381
        %v383 = vpop.f32.mrb[0].mxu0
        %384 = vmatprep.mubr.f32.mxu0 0.0
        %385 = vmatmul.mubr.f32.gmra.mrb[0].mxu0 %v295
        %v386 = vpop.f32.mrb[0].mxu0
        %v387 = vadd.f32 0.0, %v386
        %v388 = vpop.f32.mrb[0].mxu0
        %389 = vmatprep.mubr.f32.mxu0 0.0
        %390 = vmatmul.mubr.f32.gmra.mrb[0].mxu0 %v298
        %v391 = vpop.f32.mrb[0].mxu0
        %v392 = vadd.f32 0.0, %v391
        %v393 = vpop.f32.mrb[0].mxu0
        %394 = vmatprep.mubr.f32.mxu0 0.0
        %395 = vmatmul.mubr.f32.gmra.mrb[0].mxu0 %v301
        %v396 = vpop.f32.mrb[0].mxu0
        %v397 = vadd.f32 0.0, %v396
        %v398 = vpop.f32.mrb[0].mxu0
        %399 = vmatprep.mubr.f32.mxu0 0.0
        %400 = vmatmul.mubr.f32.gmra.mrb[0].mxu0 %v304
        %v401 = vpop.f32.mrb[0].mxu0
        %v402 = vadd.f32 0.0, %v401
        %v403 = vpop.f32.mrb[0].mxu0
        %404 = vmatprep.mubr.f32.mxu0 0.0
        %405 = vmatmul.mubr.f32.gmra.mrb[0].mxu0 %v307
        %v406 = vpop.f32.mrb[0].mxu0
        %v407 = vadd.f32 0.0, %v406
        %v408 = vpop.f32.mrb[0].mxu0
        %409 = vmatprep.mubr.f32.mxu0 0.0
        %410 = vmatmul.mubr.f32.gmra.mrb[0].mxu0 %v310
        %v411 = vpop.f32.mrb[0].mxu0
        %v412 = vadd.f32 0.0, %v411
        %v413 = vpop.f32.mrb[0].mxu0
        %414 = vmatprep.mubr.f32.mxu0 0.0
        %415 = vmatmul.mubr.f32.gmra.mrb[0].mxu0 %v313
        %v416 = vpop.f32.mrb[0].mxu0
        %v417 = vadd.f32 0.0, %v416
        %v418 = vpop.f32.mrb[0].mxu0
        %419 = vdwg.mxu0
        %v420 = vld [vmem:[%s4] sm:$0xff]
        %v421 = vld [vmem:[%s4 + $0x8] sm:$0xff]
        %422 = vmatprep.subr.mxu0 0.0
        %423 = vmatpush1.msra.mxu0 %v420
        %424 = vmatprep.subr.mxu0 0.0
        %425 = vmatpush1.msra.mxu0 %v421
        %426 = vmatprep.subr.mxu0 0.0
        %427 = vmatpush1.msra.mxu0 0.0
        %428 = vmatprep.subr.mxu0 0.0
        %429 = vmatpush1.msra.mxu0 0.0
        %430 = vmatprep.subr.mxu0 0.0
        %431 = vmatpush1.msra.mxu0 0.0
        %432 = vmatprep.subr.mxu0 0.0
        %433 = vmatpush1.msra.mxu0 0.0
        %434 = vmatprep.subr.mxu0 0.0
        %435 = vmatpush1.msra.mxu0 0.0
        %436 = vmatprep.subr.mxu0 0.0
        %437 = vmatpush1.msra.mxu0 0.0
        %438 = vmatprep.subr.mxu0 0.0
        %439 = vmatpush1.msra.mxu0 0.0
        %440 = vmatprep.subr.mxu0 0.0
        %441 = vmatpush1.msra.mxu0 0.0
        %442 = vmatprep.subr.mxu0 0.0
        %443 = vmatpush1.msra.mxu0 0.0
        %444 = vmatprep.subr.mxu0 0.0
        %445 = vmatpush1.msra.mxu0 0.0
        %446 = vmatprep.subr.mxu0 0.0
        %447 = vmatpush1.msra.mxu0 0.0
        %448 = vmatprep.subr.mxu0 0.0
        %449 = vmatpush1.msra.mxu0 0.0
        %450 = vmatprep.subr.mxu0 0.0
        %451 = vmatpush1.msra.mxu0 0.0
        %452 = vmatprep.subr.mxu0 0.0
        %453 = vmatpush1.msra.mxu0 0.0
        %454 = vmatprep.subr.mxu0 0.0
        %455 = vmatpush1.msra.mxu0 0.0
        %456 = vmatprep.subr.mxu0 0.0
        %457 = vmatpush1.msra.mxu0 0.0
        %458 = vmatprep.subr.mxu0 0.0
        %459 = vmatpush1.msra.mxu0 0.0
        %460 = vmatprep.subr.mxu0 0.0
        %461 = vmatpush1.msra.mxu0 0.0
        %462 = vmatprep.subr.mxu0 0.0
        %463 = vmatpush1.msra.mxu0 0.0
        %464 = vmatprep.subr.mxu0 0.0
        %465 = vmatpush1.msra.mxu0 0.0
        %466 = vmatprep.subr.mxu0 0.0
        %467 = vmatpush1.msra.mxu0 0.0
        %468 = vmatprep.subr.mxu0 0.0
        %469 = vmatpush1.msra.mxu0 0.0
        %470 = vmatprep.subr.mxu0 0.0
        %471 = vmatpush1.msra.mxu0 0.0
        %472 = vmatprep.subr.mxu0 0.0
        %473 = vmatpush1.msra.mxu0 0.0
        %474 = vmatprep.subr.mxu0 0.0
        %475 = vmatpush1.msra.mxu0 0.0
        %476 = vmatprep.subr.mxu0 0.0
        %477 = vmatpush1.msra.mxu0 0.0
        %478 = vmatprep.subr.mxu0 0.0
        %479 = vmatpush1.msra.mxu0 0.0
        %480 = vmatprep.subr.mxu0 0.0
        %481 = vmatpush1.msra.mxu0 0.0
        %482 = vmatprep.subr.mxu0 0.0
        %483 = vmatpush1.msra.mxu0 0.0
        %484 = vmatprep.subr.mxu0 0.0
        %485 = vmatpush1.msra.mxu0 0.0
        %486 = vmatprep.mubr.f32.mxu0 0.0
        %487 = vmatmul.mubr.f32.gmra.mrb[0].mxu0 %v292
        %v488 = vpop.f32.mrb[0].mxu0
        %v489 = vadd.f32 0.0, %v488
        %v490 = vpop.f32.mrb[0].mxu0
        %491 = vmatprep.mubr.f32.mxu0 0.0
        %492 = vmatmul.mubr.f32.gmra.mrb[0].mxu0 %v295
        %v493 = vpop.f32.mrb[0].mxu0
        %v494 = vadd.f32 0.0, %v493
        %v495 = vpop.f32.mrb[0].mxu0
        %496 = vmatprep.mubr.f32.mxu0 0.0
        %497 = vmatmul.mubr.f32.gmra.mrb[0].mxu0 %v298
        %v498 = vpop.f32.mrb[0].mxu0
        %v499 = vadd.f32 0.0, %v498
        %v500 = vpop.f32.mrb[0].mxu0
        %501 = vmatprep.mubr.f32.mxu0 0.0
        %502 = vmatmul.mubr.f32.gmra.mrb[0].mxu0 %v301
        %v503 = vpop.f32.mrb[0].mxu0
        %v504 = vadd.f32 0.0, %v503
        %v505 = vpop.f32.mrb[0].mxu0
        %506 = vmatprep.mubr.f32.mxu0 0.0
        %507 = vmatmul.mubr.f32.gmra.mrb[0].mxu0 %v304
        %v508 = vpop.f32.mrb[0].mxu0
        %v509 = vadd.f32 0.0, %v508
        %v510 = vpop.f32.mrb[0].mxu0
        %511 = vmatprep.mubr.f32.mxu0 0.0
        %512 = vmatmul.mubr.f32.gmra.mrb[0].mxu0 %v307
        %v513 = vpop.f32.mrb[0].mxu0
        %v514 = vadd.f32 0.0, %v513
        %v515 = vpop.f32.mrb[0].mxu0
        %516 = vmatprep.mubr.f32.mxu0 0.0
        %517 = vmatmul.mubr.f32.gmra.mrb[0].mxu0 %v310
        %v518 = vpop.f32.mrb[0].mxu0
        %v519 = vadd.f32 0.0, %v518
        %v520 = vpop.f32.mrb[0].mxu0
        %521 = vmatprep.mubr.f32.mxu0 0.0
        %522 = vmatmul.mubr.f32.gmra.mrb[0].mxu0 %v313
        %v523 = vpop.f32.mrb[0].mxu0
        %v524 = vadd.f32 0.0, %v523
        %v525 = vpop.f32.mrb[0].mxu0
        %526 = vdwg.mxu0
        %v527 = vld [vmem:[%s265 + $0x40] sm:$0xff]
        %v528 = vld [vmem:[%s265 + $0x48] sm:$0xff]
        %v529 = vld [vmem:[%s265 + $0x50] sm:$0xff]
        %v530 = vld [vmem:[%s265 + $0x58] sm:$0xff]
        %v531 = vld [vmem:[%s265 + $0x60] sm:$0xff]
        %v532 = vld [vmem:[%s265 + $0x68] sm:$0xff]
        %v533 = vld [vmem:[%s265 + $0x70] sm:$0xff]
        %v534 = vld [vmem:[%s265 + $0x78] sm:$0xff]
        %v536 = vsel %vm290, %v527, 0
        %v539 = vsel %vm290, %v528, 0
        %v542 = vsel %vm290, %v529, 0
        %v545 = vsel %vm290, %v530, 0
        %v548 = vsel %vm290, %v531, 0
        %v551 = vsel %vm290, %v532, 0
        %v554 = vsel %vm290, %v533, 0
        %v557 = vsel %vm290, %v534, 0
        %559 = vmatprep.subr.mxu0 0.0
        %560 = vmatpush1.msra.mxu0 %v288
        %561 = vmatprep.subr.mxu0 0.0
        %562 = vmatpush1.msra.mxu0 %v289
        %563 = vmatprep.subr.mxu0 0.0
        %564 = vmatpush1.msra.mxu0 0.0
        %565 = vmatprep.subr.mxu0 0.0
        %566 = vmatpush1.msra.mxu0 0.0
        %567 = vmatprep.subr.mxu0 0.0
        %568 = vmatpush1.msra.mxu0 0.0
        %569 = vmatprep.subr.mxu0 0.0
        %570 = vmatpush1.msra.mxu0 0.0
        %571 = vmatprep.subr.mxu0 0.0
        %572 = vmatpush1.msra.mxu0 0.0
        %573 = vmatprep.subr.mxu0 0.0
        %574 = vmatpush1.msra.mxu0 0.0
        %575 = vmatprep.subr.mxu0 0.0
        %576 = vmatpush1.msra.mxu0 0.0
        %577 = vmatprep.subr.mxu0 0.0
        %578 = vmatpush1.msra.mxu0 0.0
        %579 = vmatprep.subr.mxu0 0.0
        %580 = vmatpush1.msra.mxu0 0.0
        %581 = vmatprep.subr.mxu0 0.0
        %582 = vmatpush1.msra.mxu0 0.0
        %583 = vmatprep.subr.mxu0 0.0
        %584 = vmatpush1.msra.mxu0 0.0
        %585 = vmatprep.subr.mxu0 0.0
        %586 = vmatpush1.msra.mxu0 0.0
        %587 = vmatprep.subr.mxu0 0.0
        %588 = vmatpush1.msra.mxu0 0.0
        %589 = vmatprep.subr.mxu0 0.0
        %590 = vmatpush1.msra.mxu0 0.0
        %591 = vmatprep.subr.mxu0 0.0
        %592 = vmatpush1.msra.mxu0 0.0
        %593 = vmatprep.subr.mxu0 0.0
        %594 = vmatpush1.msra.mxu0 0.0
        %595 = vmatprep.subr.mxu0 0.0
        %596 = vmatpush1.msra.mxu0 0.0
        %597 = vmatprep.subr.mxu0 0.0
        %598 = vmatpush1.msra.mxu0 0.0
        %599 = vmatprep.subr.mxu0 0.0
        %600 = vmatpush1.msra.mxu0 0.0
        %601 = vmatprep.subr.mxu0 0.0
        %602 = vmatpush1.msra.mxu0 0.0
        %603 = vmatprep.subr.mxu0 0.0
        %604 = vmatpush1.msra.mxu0 0.0
        %605 = vmatprep.subr.mxu0 0.0
        %606 = vmatpush1.msra.mxu0 0.0
        %607 = vmatprep.subr.mxu0 0.0
        %608 = vmatpush1.msra.mxu0 0.0
        %609 = vmatprep.subr.mxu0 0.0
        %610 = vmatpush1.msra.mxu0 0.0
        %611 = vmatprep.subr.mxu0 0.0
        %612 = vmatpush1.msra.mxu0 0.0
        %613 = vmatprep.subr.mxu0 0.0
        %614 = vmatpush1.msra.mxu0 0.0
        %615 = vmatprep.subr.mxu0 0.0
        %616 = vmatpush1.msra.mxu0 0.0
        %617 = vmatprep.subr.mxu0 0.0
        %618 = vmatpush1.msra.mxu0 0.0
        %619 = vmatprep.subr.mxu0 0.0
        %620 = vmatpush1.msra.mxu0 0.0
        %621 = vmatprep.subr.mxu0 0.0
        %622 = vmatpush1.msra.mxu0 0.0
        %623 = vmatprep.mubr.f32.mxu0 0.0
        %624 = vmatmul.mubr.f32.gmra.mrb[0].mxu0 %v536
        %v625 = vpop.f32.mrb[0].mxu0
        %v626 = vadd.f32 0.0, %v625
        %v627 = vpop.f32.mrb[0].mxu0
        %628 = vmatprep.mubr.f32.mxu0 0.0
        %629 = vmatmul.mubr.f32.gmra.mrb[0].mxu0 %v539
        %v630 = vpop.f32.mrb[0].mxu0
        %v631 = vadd.f32 0.0, %v630
        %v632 = vpop.f32.mrb[0].mxu0
        %633 = vmatprep.mubr.f32.mxu0 0.0
        %634 = vmatmul.mubr.f32.gmra.mrb[0].mxu0 %v542
        %v635 = vpop.f32.mrb[0].mxu0
        %v636 = vadd.f32 0.0, %v635
        %v637 = vpop.f32.mrb[0].mxu0
        %638 = vmatprep.mubr.f32.mxu0 0.0
        %639 = vmatmul.mubr.f32.gmra.mrb[0].mxu0 %v545
        %v640 = vpop.f32.mrb[0].mxu0
        %v641 = vadd.f32 0.0, %v640
        %v642 = vpop.f32.mrb[0].mxu0
        %643 = vmatprep.mubr.f32.mxu0 0.0
        %644 = vmatmul.mubr.f32.gmra.mrb[0].mxu0 %v548
        %v645 = vpop.f32.mrb[0].mxu0
        %v646 = vadd.f32 0.0, %v645
        %v647 = vpop.f32.mrb[0].mxu0
        %648 = vmatprep.mubr.f32.mxu0 0.0
        %649 = vmatmul.mubr.f32.gmra.mrb[0].mxu0 %v551
        %v650 = vpop.f32.mrb[0].mxu0
        %v651 = vadd.f32 0.0, %v650
        %v652 = vpop.f32.mrb[0].mxu0
        %653 = vmatprep.mubr.f32.mxu0 0.0
        %654 = vmatmul.mubr.f32.gmra.mrb[0].mxu0 %v554
        %v655 = vpop.f32.mrb[0].mxu0
        %v656 = vadd.f32 0.0, %v655
        %v657 = vpop.f32.mrb[0].mxu0
        %658 = vmatprep.mubr.f32.mxu0 0.0
        %659 = vmatmul.mubr.f32.gmra.mrb[0].mxu0 %v557
        %v660 = vpop.f32.mrb[0].mxu0
        %v661 = vadd.f32 0.0, %v660
        %v662 = vpop.f32.mrb[0].mxu0
        %663 = vdwg.mxu0
        %664 = vmatprep.subr.mxu0 0.0
        %665 = vmatpush1.msra.mxu0 %v420
        %666 = vmatprep.subr.mxu0 0.0
        %667 = vmatpush1.msra.mxu0 %v421
        %668 = vmatprep.subr.mxu0 0.0
        %669 = vmatpush1.msra.mxu0 0.0
        %670 = vmatprep.subr.mxu0 0.0
        %671 = vmatpush1.msra.mxu0 0.0
        %672 = vmatprep.subr.mxu0 0.0
        %673 = vmatpush1.msra.mxu0 0.0
        %674 = vmatprep.subr.mxu0 0.0
        %675 = vmatpush1.msra.mxu0 0.0
        %676 = vmatprep.subr.mxu0 0.0
        %677 = vmatpush1.msra.mxu0 0.0
        %678 = vmatprep.subr.mxu0 0.0
        %679 = vmatpush1.msra.mxu0 0.0
        %680 = vmatprep.subr.mxu0 0.0
        %681 = vmatpush1.msra.mxu0 0.0
        %682 = vmatprep.subr.mxu0 0.0
        %683 = vmatpush1.msra.mxu0 0.0
        %684 = vmatprep.subr.mxu0 0.0
        %685 = vmatpush1.msra.mxu0 0.0
        %686 = vmatprep.subr.mxu0 0.0
        %687 = vmatpush1.msra.mxu0 0.0
        %688 = vmatprep.subr.mxu0 0.0
        %689 = vmatpush1.msra.mxu0 0.0
        %690 = vmatprep.subr.mxu0 0.0
        %691 = vmatpush1.msra.mxu0 0.0
        %692 = vmatprep.subr.mxu0 0.0
        %693 = vmatpush1.msra.mxu0 0.0
        %694 = vmatprep.subr.mxu0 0.0
        %695 = vmatpush1.msra.mxu0 0.0
        %696 = vmatprep.subr.mxu0 0.0
        %697 = vmatpush1.msra.mxu0 0.0
        %698 = vmatprep.subr.mxu0 0.0
        %699 = vmatpush1.msra.mxu0 0.0
        %700 = vmatprep.subr.mxu0 0.0
        %701 = vmatpush1.msra.mxu0 0.0
        %702 = vmatprep.subr.mxu0 0.0
        %703 = vmatpush1.msra.mxu0 0.0
        %704 = vmatprep.subr.mxu0 0.0
        %705 = vmatpush1.msra.mxu0 0.0
        %706 = vmatprep.subr.mxu0 0.0
        %707 = vmatpush1.msra.mxu0 0.0
        %708 = vmatprep.subr.mxu0 0.0
        %709 = vmatpush1.msra.mxu0 0.0
        %710 = vmatprep.subr.mxu0 0.0
        %711 = vmatpush1.msra.mxu0 0.0
        %712 = vmatprep.subr.mxu0 0.0
        %713 = vmatpush1.msra.mxu0 0.0
        %714 = vmatprep.subr.mxu0 0.0
        %715 = vmatpush1.msra.mxu0 0.0
        %716 = vmatprep.subr.mxu0 0.0
        %717 = vmatpush1.msra.mxu0 0.0
        %718 = vmatprep.subr.mxu0 0.0
        %719 = vmatpush1.msra.mxu0 0.0
        %720 = vmatprep.subr.mxu0 0.0
        %721 = vmatpush1.msra.mxu0 0.0
        %722 = vmatprep.subr.mxu0 0.0
        %723 = vmatpush1.msra.mxu0 0.0
        %724 = vmatprep.subr.mxu0 0.0
        %725 = vmatpush1.msra.mxu0 0.0
        %726 = vmatprep.subr.mxu0 0.0
        %727 = vmatpush1.msra.mxu0 0.0
        %728 = vmatprep.mubr.f32.mxu0 0.0
        %729 = vmatmul.mubr.f32.gmra.mrb[0].mxu0 %v536
        %v730 = vpop.f32.mrb[0].mxu0
        %v731 = vadd.f32 0.0, %v730
        %v732 = vpop.f32.mrb[0].mxu0
        %733 = vmatprep.mubr.f32.mxu0 0.0
        %734 = vmatmul.mubr.f32.gmra.mrb[0].mxu0 %v539
        %v735 = vpop.f32.mrb[0].mxu0
        %v736 = vadd.f32 0.0, %v735
        %v737 = vpop.f32.mrb[0].mxu0
        %738 = vmatprep.mubr.f32.mxu0 0.0
        %739 = vmatmul.mubr.f32.gmra.mrb[0].mxu0 %v542
        %v740 = vpop.f32.mrb[0].mxu0
        %v741 = vadd.f32 0.0, %v740
        %v742 = vpop.f32.mrb[0].mxu0
        %743 = vmatprep.mubr.f32.mxu0 0.0
        %744 = vmatmul.mubr.f32.gmra.mrb[0].mxu0 %v545
        %v745 = vpop.f32.mrb[0].mxu0
        %v746 = vadd.f32 0.0, %v745
        %v747 = vpop.f32.mrb[0].mxu0
        %748 = vmatprep.mubr.f32.mxu0 0.0
        %749 = vmatmul.mubr.f32.gmra.mrb[0].mxu0 %v548
        %v750 = vpop.f32.mrb[0].mxu0
        %v751 = vadd.f32 0.0, %v750
        %v752 = vpop.f32.mrb[0].mxu0
        %753 = vmatprep.mubr.f32.mxu0 0.0
        %754 = vmatmul.mubr.f32.gmra.mrb[0].mxu0 %v551
        %v755 = vpop.f32.mrb[0].mxu0
        %v756 = vadd.f32 0.0, %v755
        %v757 = vpop.f32.mrb[0].mxu0
        %758 = vmatprep.mubr.f32.mxu0 0.0
        %759 = vmatmul.mubr.f32.gmra.mrb[0].mxu0 %v554
        %v760 = vpop.f32.mrb[0].mxu0
        %v761 = vadd.f32 0.0, %v760
        %v762 = vpop.f32.mrb[0].mxu0
        %763 = vmatprep.mubr.f32.mxu0 0.0
        %764 = vmatmul.mubr.f32.gmra.mrb[0].mxu0 %v557
        %v765 = vpop.f32.mrb[0].mxu0
        %v766 = vadd.f32 0.0, %v765
        %v767 = vpop.f32.mrb[0].mxu0
        %768 = vdwg.mxu0
        %v769 = vmax.f32 %v382, %v626
        %v770 = vmax.f32 %v387, %v631
        %v771 = vmax.f32 %v392, %v636
        %v772 = vmax.f32 %v397, %v641
        %v773 = vmax.f32 %v402, %v646
        %v774 = vmax.f32 %v407, %v651
        %v775 = vmax.f32 %v412, %v656
        %v776 = vmax.f32 %v417, %v661
        %v777 = vmax.f32 %v489, %v731
        %v778 = vmax.f32 %v494, %v736
        %v779 = vmax.f32 %v499, %v741
        %v780 = vmax.f32 %v504, %v746
        %v781 = vmax.f32 %v509, %v751
        %v782 = vmax.f32 %v514, %v756
        %v783 = vmax.f32 %v519, %v761
        %v784 = vmax.f32 %v524, %v766
        %v785 = vld [vmem:[%s265 + $0x80] sm:$0xff]
        %v786 = vld [vmem:[%s265 + $0x88] sm:$0xff]
        %v787 = vld [vmem:[%s265 + $0x90] sm:$0xff]
        %v788 = vld [vmem:[%s265 + $0x98] sm:$0xff]
        %v789 = vld [vmem:[%s265 + $0xa0] sm:$0xff]
        %v790 = vld [vmem:[%s265 + $0xa8] sm:$0xff]
        %v791 = vld [vmem:[%s265 + $0xb0] sm:$0xff]
        %v792 = vld [vmem:[%s265 + $0xb8] sm:$0xff]
        %v794 = vsel %vm290, %v785, 0
        %v797 = vsel %vm290, %v786, 0
        %v800 = vsel %vm290, %v787, 0
        %v803 = vsel %vm290, %v788, 0
        %v806 = vsel %vm290, %v789, 0
        %v809 = vsel %vm290, %v790, 0
        %v812 = vsel %vm290, %v791, 0
        %v815 = vsel %vm290, %v792, 0
        %817 = vmatprep.subr.mxu0 0.0
        %818 = vmatpush1.msra.mxu0 %v288
        %819 = vmatprep.subr.mxu0 0.0
        %820 = vmatpush1.msra.mxu0 %v289
        %821 = vmatprep.subr.mxu0 0.0
        %822 = vmatpush1.msra.mxu0 0.0
        %823 = vmatprep.subr.mxu0 0.0
        %824 = vmatpush1.msra.mxu0 0.0
        %825 = vmatprep.subr.mxu0 0.0
        %826 = vmatpush1.msra.mxu0 0.0
        %827 = vmatprep.subr.mxu0 0.0
        %828 = vmatpush1.msra.mxu0 0.0
        %829 = vmatprep.subr.mxu0 0.0
        %830 = vmatpush1.msra.mxu0 0.0
        %831 = vmatprep.subr.mxu0 0.0
        %832 = vmatpush1.msra.mxu0 0.0
        %833 = vmatprep.subr.mxu0 0.0
        %834 = vmatpush1.msra.mxu0 0.0
        %835 = vmatprep.subr.mxu0 0.0
        %836 = vmatpush1.msra.mxu0 0.0
        %837 = vmatprep.subr.mxu0 0.0
        %838 = vmatpush1.msra.mxu0 0.0
        %839 = vmatprep.subr.mxu0 0.0
        %840 = vmatpush1.msra.mxu0 0.0
        %841 = vmatprep.subr.mxu0 0.0
        %842 = vmatpush1.msra.mxu0 0.0
        %843 = vmatprep.subr.mxu0 0.0
        %844 = vmatpush1.msra.mxu0 0.0
        %845 = vmatprep.subr.mxu0 0.0
        %846 = vmatpush1.msra.mxu0 0.0
        %847 = vmatprep.subr.mxu0 0.0
        %848 = vmatpush1.msra.mxu0 0.0
        %849 = vmatprep.subr.mxu0 0.0
        %850 = vmatpush1.msra.mxu0 0.0
        %851 = vmatprep.subr.mxu0 0.0
        %852 = vmatpush1.msra.mxu0 0.0
        %853 = vmatprep.subr.mxu0 0.0
        %854 = vmatpush1.msra.mxu0 0.0
        %855 = vmatprep.subr.mxu0 0.0
        %856 = vmatpush1.msra.mxu0 0.0
        %857 = vmatprep.subr.mxu0 0.0
        %858 = vmatpush1.msra.mxu0 0.0
        %859 = vmatprep.subr.mxu0 0.0
        %860 = vmatpush1.msra.mxu0 0.0
        %861 = vmatprep.subr.mxu0 0.0
        %862 = vmatpush1.msra.mxu0 0.0
        %863 = vmatprep.subr.mxu0 0.0
        %864 = vmatpush1.msra.mxu0 0.0
        %865 = vmatprep.subr.mxu0 0.0
        %866 = vmatpush1.msra.mxu0 0.0
        %867 = vmatprep.subr.mxu0 0.0
        %868 = vmatpush1.msra.mxu0 0.0
        %869 = vmatprep.subr.mxu0 0.0
        %870 = vmatpush1.msra.mxu0 0.0
        %871 = vmatprep.subr.mxu0 0.0
        %872 = vmatpush1.msra.mxu0 0.0
        %873 = vmatprep.subr.mxu0 0.0
        %874 = vmatpush1.msra.mxu0 0.0
        %875 = vmatprep.subr.mxu0 0.0
        %876 = vmatpush1.msra.mxu0 0.0
        %877 = vmatprep.subr.mxu0 0.0
        %878 = vmatpush1.msra.mxu0 0.0
        %879 = vmatprep.subr.mxu0 0.0
        %880 = vmatpush1.msra.mxu0 0.0
        %881 = vmatprep.mubr.f32.mxu0 0.0
        %882 = vmatmul.mubr.f32.gmra.mrb[0].mxu0 %v794
        %v883 = vpop.f32.mrb[0].mxu0
        %v884 = vadd.f32 0.0, %v883
        %v885 = vpop.f32.mrb[0].mxu0
        %886 = vmatprep.mubr.f32.mxu0 0.0
        %887 = vmatmul.mubr.f32.gmra.mrb[0].mxu0 %v797
        %v888 = vpop.f32.mrb[0].mxu0
        %v889 = vadd.f32 0.0, %v888
        %v890 = vpop.f32.mrb[0].mxu0
        %891 = vmatprep.mubr.f32.mxu0 0.0
        %892 = vmatmul.mubr.f32.gmra.mrb[0].mxu0 %v800
        %v893 = vpop.f32.mrb[0].mxu0
        %v894 = vadd.f32 0.0, %v893
        %v895 = vpop.f32.mrb[0].mxu0
        %896 = vmatprep.mubr.f32.mxu0 0.0
        %897 = vmatmul.mubr.f32.gmra.mrb[0].mxu0 %v803
        %v898 = vpop.f32.mrb[0].mxu0
        %v899 = vadd.f32 0.0, %v898
        %v900 = vpop.f32.mrb[0].mxu0
        %901 = vmatprep.mubr.f32.mxu0 0.0
        %902 = vmatmul.mubr.f32.gmra.mrb[0].mxu0 %v806
        %v903 = vpop.f32.mrb[0].mxu0
        %v904 = vadd.f32 0.0, %v903
        %v905 = vpop.f32.mrb[0].mxu0
        %906 = vmatprep.mubr.f32.mxu0 0.0
        %907 = vmatmul.mubr.f32.gmra.mrb[0].mxu0 %v809
        %v908 = vpop.f32.mrb[0].mxu0
        %v909 = vadd.f32 0.0, %v908
        %v910 = vpop.f32.mrb[0].mxu0
        %911 = vmatprep.mubr.f32.mxu0 0.0
        %912 = vmatmul.mubr.f32.gmra.mrb[0].mxu0 %v812
        %v913 = vpop.f32.mrb[0].mxu0
        %v914 = vadd.f32 0.0, %v913
        %v915 = vpop.f32.mrb[0].mxu0
        %916 = vmatprep.mubr.f32.mxu0 0.0
        %917 = vmatmul.mubr.f32.gmra.mrb[0].mxu0 %v815
        %v918 = vpop.f32.mrb[0].mxu0
        %v919 = vadd.f32 0.0, %v918
        %v920 = vpop.f32.mrb[0].mxu0
        %921 = vdwg.mxu0
        %922 = vmatprep.subr.mxu0 0.0
        %923 = vmatpush1.msra.mxu0 %v420
        %924 = vmatprep.subr.mxu0 0.0
        %925 = vmatpush1.msra.mxu0 %v421
        %926 = vmatprep.subr.mxu0 0.0
        %927 = vmatpush1.msra.mxu0 0.0
        %928 = vmatprep.subr.mxu0 0.0
        %929 = vmatpush1.msra.mxu0 0.0
        %930 = vmatprep.subr.mxu0 0.0
        %931 = vmatpush1.msra.mxu0 0.0
        %932 = vmatprep.subr.mxu0 0.0
        %933 = vmatpush1.msra.mxu0 0.0
        %934 = vmatprep.subr.mxu0 0.0
        %935 = vmatpush1.msra.mxu0 0.0
        %936 = vmatprep.subr.mxu0 0.0
        %937 = vmatpush1.msra.mxu0 0.0
        %938 = vmatprep.subr.mxu0 0.0
        %939 = vmatpush1.msra.mxu0 0.0
        %940 = vmatprep.subr.mxu0 0.0
        %941 = vmatpush1.msra.mxu0 0.0
        %942 = vmatprep.subr.mxu0 0.0
        %943 = vmatpush1.msra.mxu0 0.0
        %944 = vmatprep.subr.mxu0 0.0
        %945 = vmatpush1.msra.mxu0 0.0
        %946 = vmatprep.subr.mxu0 0.0
        %947 = vmatpush1.msra.mxu0 0.0
        %948 = vmatprep.subr.mxu0 0.0
        %949 = vmatpush1.msra.mxu0 0.0
        %950 = vmatprep.subr.mxu0 0.0
        %951 = vmatpush1.msra.mxu0 0.0
        %952 = vmatprep.subr.mxu0 0.0
        %953 = vmatpush1.msra.mxu0 0.0
        %954 = vmatprep.subr.mxu0 0.0
        %955 = vmatpush1.msra.mxu0 0.0
        %956 = vmatprep.subr.mxu0 0.0
        %957 = vmatpush1.msra.mxu0 0.0
        %958 = vmatprep.subr.mxu0 0.0
        %959 = vmatpush1.msra.mxu0 0.0
        %960 = vmatprep.subr.mxu0 0.0
        %961 = vmatpush1.msra.mxu0 0.0
        %962 = vmatprep.subr.mxu0 0.0
        %963 = vmatpush1.msra.mxu0 0.0
        %964 = vmatprep.subr.mxu0 0.0
        %965 = vmatpush1.msra.mxu0 0.0
        %966 = vmatprep.subr.mxu0 0.0
        %967 = vmatpush1.msra.mxu0 0.0
        %968 = vmatprep.subr.mxu0 0.0
        %969 = vmatpush1.msra.mxu0 0.0
        %970 = vmatprep.subr.mxu0 0.0
        %971 = vmatpush1.msra.mxu0 0.0
        %972 = vmatprep.subr.mxu0 0.0
        %973 = vmatpush1.msra.mxu0 0.0
        %974 = vmatprep.subr.mxu0 0.0
        %975 = vmatpush1.msra.mxu0 0.0
        %976 = vmatprep.subr.mxu0 0.0
        %977 = vmatpush1.msra.mxu0 0.0
        %978 = vmatprep.subr.mxu0 0.0
        %979 = vmatpush1.msra.mxu0 0.0
        %980 = vmatprep.subr.mxu0 0.0
        %981 = vmatpush1.msra.mxu0 0.0
        %982 = vmatprep.subr.mxu0 0.0
        %983 = vmatpush1.msra.mxu0 0.0
        %984 = vmatprep.subr.mxu0 0.0
        %985 = vmatpush1.msra.mxu0 0.0
        %986 = vmatprep.mubr.f32.mxu0 0.0
        %987 = vmatmul.mubr.f32.gmra.mrb[0].mxu0 %v794
        %v988 = vpop.f32.mrb[0].mxu0
        %v989 = vadd.f32 0.0, %v988
        %v990 = vpop.f32.mrb[0].mxu0
        %991 = vmatprep.mubr.f32.mxu0 0.0
        %992 = vmatmul.mubr.f32.gmra.mrb[0].mxu0 %v797
        %v993 = vpop.f32.mrb[0].mxu0
        %v994 = vadd.f32 0.0, %v993
        %v995 = vpop.f32.mrb[0].mxu0
        %996 = vmatprep.mubr.f32.mxu0 0.0
        %997 = vmatmul.mubr.f32.gmra.mrb[0].mxu0 %v800
        %v998 = vpop.f32.mrb[0].mxu0
        %v999 = vadd.f32 0.0, %v998
        %v1000 = vpop.f32.mrb[0].mxu0
        %1001 = vmatprep.mubr.f32.mxu0 0.0
        %1002 = vmatmul.mubr.f32.gmra.mrb[0].mxu0 %v803
        %v1003 = vpop.f32.mrb[0].mxu0
        %v1004 = vadd.f32 0.0, %v1003
        %v1005 = vpop.f32.mrb[0].mxu0
        %1006 = vmatprep.mubr.f32.mxu0 0.0
        %1007 = vmatmul.mubr.f32.gmra.mrb[0].mxu0 %v806
        %v1008 = vpop.f32.mrb[0].mxu0
        %v1009 = vadd.f32 0.0, %v1008
        %v1010 = vpop.f32.mrb[0].mxu0
        %1011 = vmatprep.mubr.f32.mxu0 0.0
        %1012 = vmatmul.mubr.f32.gmra.mrb[0].mxu0 %v809
        %v1013 = vpop.f32.mrb[0].mxu0
        %v1014 = vadd.f32 0.0, %v1013
        %v1015 = vpop.f32.mrb[0].mxu0
        %1016 = vmatprep.mubr.f32.mxu0 0.0
        %1017 = vmatmul.mubr.f32.gmra.mrb[0].mxu0 %v812
        %v1018 = vpop.f32.mrb[0].mxu0
        %v1019 = vadd.f32 0.0, %v1018
        %v1020 = vpop.f32.mrb[0].mxu0
        %1021 = vmatprep.mubr.f32.mxu0 0.0
        %1022 = vmatmul.mubr.f32.gmra.mrb[0].mxu0 %v815
        %v1023 = vpop.f32.mrb[0].mxu0
        %v1024 = vadd.f32 0.0, %v1023
        %v1025 = vpop.f32.mrb[0].mxu0
        %1026 = vdwg.mxu0
        %v1027 = vmax.f32 %v769, %v884
        %v1028 = vmax.f32 %v770, %v889
        %v1029 = vmax.f32 %v771, %v894
        %v1030 = vmax.f32 %v772, %v899
        %v1031 = vmax.f32 %v773, %v904
        %v1032 = vmax.f32 %v774, %v909
        %v1033 = vmax.f32 %v775, %v914
        %v1034 = vmax.f32 %v776, %v919
        %v1035 = vmax.f32 %v777, %v989
        %v1036 = vmax.f32 %v778, %v994
        %v1037 = vmax.f32 %v779, %v999
        %v1038 = vmax.f32 %v780, %v1004
        %v1039 = vmax.f32 %v781, %v1009
        %v1040 = vmax.f32 %v782, %v1014
        %v1041 = vmax.f32 %v783, %v1019
        %v1042 = vmax.f32 %v784, %v1024
        %v1043 = vld [vmem:[%s265 + $0xc0] sm:$0xff]
        %v1044 = vld [vmem:[%s265 + $0xc8] sm:$0xff]
        %v1045 = vld [vmem:[%s265 + $0xd0] sm:$0xff]
        %v1046 = vld [vmem:[%s265 + $0xd8] sm:$0xff]
        %v1047 = vld [vmem:[%s265 + $0xe0] sm:$0xff]
        %v1048 = vld [vmem:[%s265 + $0xe8] sm:$0xff]
        %v1049 = vld [vmem:[%s265 + $0xf0] sm:$0xff]
        %v1050 = vld [vmem:[%s265 + $0xf8] sm:$0xff]
        %v1052 = vsel %vm290, %v1043, 0
        %v1055 = vsel %vm290, %v1044, 0
        %v1058 = vsel %vm290, %v1045, 0
        %v1061 = vsel %vm290, %v1046, 0
        %v1064 = vsel %vm290, %v1047, 0
        %v1067 = vsel %vm290, %v1048, 0
        %v1070 = vsel %vm290, %v1049, 0
        %v1073 = vsel %vm290, %v1050, 0
        %1075 = vmatprep.subr.mxu0 0.0
        %1076 = vmatpush1.msra.mxu0 %v288
        %1077 = vmatprep.subr.mxu0 0.0
        %1078 = vmatpush1.msra.mxu0 %v289
        %1079 = vmatprep.subr.mxu0 0.0
        %1080 = vmatpush1.msra.mxu0 0.0
        %1081 = vmatprep.subr.mxu0 0.0
        %1082 = vmatpush1.msra.mxu0 0.0
        %1083 = vmatprep.subr.mxu0 0.0
        %1084 = vmatpush1.msra.mxu0 0.0
        %1085 = vmatprep.subr.mxu0 0.0
        %1086 = vmatpush1.msra.mxu0 0.0
        %1087 = vmatprep.subr.mxu0 0.0
        %1088 = vmatpush1.msra.mxu0 0.0
        %1089 = vmatprep.subr.mxu0 0.0
        %1090 = vmatpush1.msra.mxu0 0.0
        %1091 = vmatprep.subr.mxu0 0.0
        %1092 = vmatpush1.msra.mxu0 0.0
        %1093 = vmatprep.subr.mxu0 0.0
        %1094 = vmatpush1.msra.mxu0 0.0
        %1095 = vmatprep.subr.mxu0 0.0
        %1096 = vmatpush1.msra.mxu0 0.0
        %1097 = vmatprep.subr.mxu0 0.0
        %1098 = vmatpush1.msra.mxu0 0.0
        %1099 = vmatprep.subr.mxu0 0.0
        %1100 = vmatpush1.msra.mxu0 0.0
        %1101 = vmatprep.subr.mxu0 0.0
        %1102 = vmatpush1.msra.mxu0 0.0
        %1103 = vmatprep.subr.mxu0 0.0
        %1104 = vmatpush1.msra.mxu0 0.0
        %1105 = vmatprep.subr.mxu0 0.0
        %1106 = vmatpush1.msra.mxu0 0.0
        %1107 = vmatprep.subr.mxu0 0.0
        %1108 = vmatpush1.msra.mxu0 0.0
        %1109 = vmatprep.subr.mxu0 0.0
        %1110 = vmatpush1.msra.mxu0 0.0
        %1111 = vmatprep.subr.mxu0 0.0
        %1112 = vmatpush1.msra.mxu0 0.0
        %1113 = vmatprep.subr.mxu0 0.0
        %1114 = vmatpush1.msra.mxu0 0.0
        %1115 = vmatprep.subr.mxu0 0.0
        %1116 = vmatpush1.msra.mxu0 0.0
        %1117 = vmatprep.subr.mxu0 0.0
        %1118 = vmatpush1.msra.mxu0 0.0
        %1119 = vmatprep.subr.mxu0 0.0
        %1120 = vmatpush1.msra.mxu0 0.0
        %1121 = vmatprep.subr.mxu0 0.0
        %1122 = vmatpush1.msra.mxu0 0.0
        %1123 = vmatprep.subr.mxu0 0.0
        %1124 = vmatpush1.msra.mxu0 0.0
        %1125 = vmatprep.subr.mxu0 0.0
        %1126 = vmatpush1.msra.mxu0 0.0
        %1127 = vmatprep.subr.mxu0 0.0
        %1128 = vmatpush1.msra.mxu0 0.0
        %1129 = vmatprep.subr.mxu0 0.0
        %1130 = vmatpush1.msra.mxu0 0.0
        %1131 = vmatprep.subr.mxu0 0.0
        %1132 = vmatpush1.msra.mxu0 0.0
        %1133 = vmatprep.subr.mxu0 0.0
        %1134 = vmatpush1.msra.mxu0 0.0
        %1135 = vmatprep.subr.mxu0 0.0
        %1136 = vmatpush1.msra.mxu0 0.0
        %1137 = vmatprep.subr.mxu0 0.0
        %1138 = vmatpush1.msra.mxu0 0.0
        %1139 = vmatprep.mubr.f32.mxu0 0.0
        %1140 = vmatmul.mubr.f32.gmra.mrb[0].mxu0 %v1052
        %v1141 = vpop.f32.mrb[0].mxu0
        %v1142 = vadd.f32 0.0, %v1141
        %v1143 = vpop.f32.mrb[0].mxu0
        %1144 = vmatprep.mubr.f32.mxu0 0.0
        %1145 = vmatmul.mubr.f32.gmra.mrb[0].mxu0 %v1055
        %v1146 = vpop.f32.mrb[0].mxu0
        %v1147 = vadd.f32 0.0, %v1146
        %v1148 = vpop.f32.mrb[0].mxu0
        %1149 = vmatprep.mubr.f32.mxu0 0.0
        %1150 = vmatmul.mubr.f32.gmra.mrb[0].mxu0 %v1058
        %v1151 = vpop.f32.mrb[0].mxu0
        %v1152 = vadd.f32 0.0, %v1151
        %v1153 = vpop.f32.mrb[0].mxu0
        %1154 = vmatprep.mubr.f32.mxu0 0.0
        %1155 = vmatmul.mubr.f32.gmra.mrb[0].mxu0 %v1061
        %v1156 = vpop.f32.mrb[0].mxu0
        %v1157 = vadd.f32 0.0, %v1156
        %v1158 = vpop.f32.mrb[0].mxu0
        %1159 = vmatprep.mubr.f32.mxu0 0.0
        %1160 = vmatmul.mubr.f32.gmra.mrb[0].mxu0 %v1064
        %v1161 = vpop.f32.mrb[0].mxu0
        %v1162 = vadd.f32 0.0, %v1161
        %v1163 = vpop.f32.mrb[0].mxu0
        %1164 = vmatprep.mubr.f32.mxu0 0.0
        %1165 = vmatmul.mubr.f32.gmra.mrb[0].mxu0 %v1067
        %v1166 = vpop.f32.mrb[0].mxu0
        %v1167 = vadd.f32 0.0, %v1166
        %v1168 = vpop.f32.mrb[0].mxu0
        %1169 = vmatprep.mubr.f32.mxu0 0.0
        %1170 = vmatmul.mubr.f32.gmra.mrb[0].mxu0 %v1070
        %v1171 = vpop.f32.mrb[0].mxu0
        %v1172 = vadd.f32 0.0, %v1171
        %v1173 = vpop.f32.mrb[0].mxu0
        %1174 = vmatprep.mubr.f32.mxu0 0.0
        %1175 = vmatmul.mubr.f32.gmra.mrb[0].mxu0 %v1073
        %v1176 = vpop.f32.mrb[0].mxu0
        %v1177 = vadd.f32 0.0, %v1176
        %v1178 = vpop.f32.mrb[0].mxu0
        %1179 = vdwg.mxu0
        %1180 = vmatprep.subr.mxu0 0.0
        %1181 = vmatpush1.msra.mxu0 %v420
        %1182 = vmatprep.subr.mxu0 0.0
        %1183 = vmatpush1.msra.mxu0 %v421
        %1184 = vmatprep.subr.mxu0 0.0
        %1185 = vmatpush1.msra.mxu0 0.0
        %1186 = vmatprep.subr.mxu0 0.0
        %1187 = vmatpush1.msra.mxu0 0.0
        %1188 = vmatprep.subr.mxu0 0.0
        %1189 = vmatpush1.msra.mxu0 0.0
        %1190 = vmatprep.subr.mxu0 0.0
        %1191 = vmatpush1.msra.mxu0 0.0
        %1192 = vmatprep.subr.mxu0 0.0
        %1193 = vmatpush1.msra.mxu0 0.0
        %1194 = vmatprep.subr.mxu0 0.0
        %1195 = vmatpush1.msra.mxu0 0.0
        %1196 = vmatprep.subr.mxu0 0.0
        %1197 = vmatpush1.msra.mxu0 0.0
        %1198 = vmatprep.subr.mxu0 0.0
        %1199 = vmatpush1.msra.mxu0 0.0
        %1200 = vmatprep.subr.mxu0 0.0
        %1201 = vmatpush1.msra.mxu0 0.0
        %1202 = vmatprep.subr.mxu0 0.0
        %1203 = vmatpush1.msra.mxu0 0.0
        %1204 = vmatprep.subr.mxu0 0.0
        %1205 = vmatpush1.msra.mxu0 0.0
        %1206 = vmatprep.subr.mxu0 0.0
        %1207 = vmatpush1.msra.mxu0 0.0
        %1208 = vmatprep.subr.mxu0 0.0
        %1209 = vmatpush1.msra.mxu0 0.0
        %1210 = vmatprep.subr.mxu0 0.0
        %1211 = vmatpush1.msra.mxu0 0.0
        %1212 = vmatprep.subr.mxu0 0.0
        %1213 = vmatpush1.msra.mxu0 0.0
        %1214 = vmatprep.subr.mxu0 0.0
        %1215 = vmatpush1.msra.mxu0 0.0
        %1216 = vmatprep.subr.mxu0 0.0
        %1217 = vmatpush1.msra.mxu0 0.0
        %1218 = vmatprep.subr.mxu0 0.0
        %1219 = vmatpush1.msra.mxu0 0.0
        %1220 = vmatprep.subr.mxu0 0.0
        %1221 = vmatpush1.msra.mxu0 0.0
        %1222 = vmatprep.subr.mxu0 0.0
        %1223 = vmatpush1.msra.mxu0 0.0
        %1224 = vmatprep.subr.mxu0 0.0
        %1225 = vmatpush1.msra.mxu0 0.0
        %1226 = vmatprep.subr.mxu0 0.0
        %1227 = vmatpush1.msra.mxu0 0.0
        %1228 = vmatprep.subr.mxu0 0.0
        %1229 = vmatpush1.msra.mxu0 0.0
        %1230 = vmatprep.subr.mxu0 0.0
        %1231 = vmatpush1.msra.mxu0 0.0
        %1232 = vmatprep.subr.mxu0 0.0
        %1233 = vmatpush1.msra.mxu0 0.0
        %1234 = vmatprep.subr.mxu0 0.0
        %1235 = vmatpush1.msra.mxu0 0.0
        %1236 = vmatprep.subr.mxu0 0.0
        %1237 = vmatpush1.msra.mxu0 0.0
        %1238 = vmatprep.subr.mxu0 0.0
        %1239 = vmatpush1.msra.mxu0 0.0
        %1240 = vmatprep.subr.mxu0 0.0
        %1241 = vmatpush1.msra.mxu0 0.0
        %1242 = vmatprep.subr.mxu0 0.0
        %1243 = vmatpush1.msra.mxu0 0.0
        %1244 = vmatprep.mubr.f32.mxu0 0.0
        %1245 = vmatmul.mubr.f32.gmra.mrb[0].mxu0 %v1052
        %v1246 = vpop.f32.mrb[0].mxu0
        %v1247 = vadd.f32 0.0, %v1246
        %v1248 = vpop.f32.mrb[0].mxu0
        %1249 = vmatprep.mubr.f32.mxu0 0.0
        %1250 = vmatmul.mubr.f32.gmra.mrb[0].mxu0 %v1055
        %v1251 = vpop.f32.mrb[0].mxu0
        %v1252 = vadd.f32 0.0, %v1251
        %v1253 = vpop.f32.mrb[0].mxu0
        %1254 = vmatprep.mubr.f32.mxu0 0.0
        %1255 = vmatmul.mubr.f32.gmra.mrb[0].mxu0 %v1058
        %v1256 = vpop.f32.mrb[0].mxu0
        %v1257 = vadd.f32 0.0, %v1256
        %v1258 = vpop.f32.mrb[0].mxu0
        %1259 = vmatprep.mubr.f32.mxu0 0.0
        %1260 = vmatmul.mubr.f32.gmra.mrb[0].mxu0 %v1061
        %v1261 = vpop.f32.mrb[0].mxu0
        %v1262 = vadd.f32 0.0, %v1261
        %v1263 = vpop.f32.mrb[0].mxu0
        %1264 = vmatprep.mubr.f32.mxu0 0.0
        %1265 = vmatmul.mubr.f32.gmra.mrb[0].mxu0 %v1064
        %v1266 = vpop.f32.mrb[0].mxu0
        %v1267 = vadd.f32 0.0, %v1266
        %v1268 = vpop.f32.mrb[0].mxu0
        %1269 = vmatprep.mubr.f32.mxu0 0.0
        %1270 = vmatmul.mubr.f32.gmra.mrb[0].mxu0 %v1067
        %v1271 = vpop.f32.mrb[0].mxu0
        %v1272 = vadd.f32 0.0, %v1271
        %v1273 = vpop.f32.mrb[0].mxu0
        %1274 = vmatprep.mubr.f32.mxu0 0.0
        %1275 = vmatmul.mubr.f32.gmra.mrb[0].mxu0 %v1070
        %v1276 = vpop.f32.mrb[0].mxu0
        %v1277 = vadd.f32 0.0, %v1276
        %v1278 = vpop.f32.mrb[0].mxu0
        %1279 = vmatprep.mubr.f32.mxu0 0.0
        %1280 = vmatmul.mubr.f32.gmra.mrb[0].mxu0 %v1073
        %v1281 = vpop.f32.mrb[0].mxu0
        %v1282 = vadd.f32 0.0, %v1281
        %v1283 = vpop.f32.mrb[0].mxu0
        %1284 = vdwg.mxu0
        %v1285 = vmax.f32 %v1027, %v1142
        %v1286 = vmax.f32 %v1028, %v1147
        %v1287 = vmax.f32 %v1029, %v1152
        %v1288 = vmax.f32 %v1030, %v1157
        %v1289 = vmax.f32 %v1031, %v1162
        %v1290 = vmax.f32 %v1032, %v1167
        %v1291 = vmax.f32 %v1033, %v1172
        %v1292 = vmax.f32 %v1034, %v1177
        %v1293 = vmax.f32 %v1035, %v1247
        %v1294 = vmax.f32 %v1036, %v1252
        %v1295 = vmax.f32 %v1037, %v1257
        %v1296 = vmax.f32 %v1038, %v1262
        %v1297 = vmax.f32 %v1039, %v1267
        %v1298 = vmax.f32 %v1040, %v1272
        %v1299 = vmax.f32 %v1041, %v1277
        %v1300 = vmax.f32 %v1042, %v1282
        %vm1301 = vcmask 15360
        %1302 = vst.msk [vmem:[#allocation2] sm:$0xff] %vm1301, %v1285
        %1303 = vst.msk [vmem:[#allocation2 + $0x8] sm:$0xff] %vm1301, %v1286
        %1304 = vst.msk [vmem:[#allocation2 + $0x10] sm:$0xff] %vm1301, %v1287
        %1305 = vst.msk [vmem:[#allocation2 + $0x18] sm:$0xff] %vm1301, %v1288
        %1306 = vst.msk [vmem:[#allocation2 + $0x20] sm:$0xff] %vm1301, %v1289
        %1307 = vst.msk [vmem:[#allocation2 + $0x28] sm:$0xff] %vm1301, %v1290
        %1308 = vst.msk [vmem:[#allocation2 + $0x30] sm:$0xff] %vm1301, %v1291
        %1309 = vst.msk [vmem:[#allocation2 + $0x38] sm:$0xff] %vm1301, %v1292
        %vm1310 = vcmask 64512
        %1311 = vst.msk [vmem:[#allocation3] sm:$0xff] %vm1310, %v1293
        %1312 = vst.msk [vmem:[#allocation3 + $0x8] sm:$0xff] %vm1310, %v1294
        %1313 = vst.msk [vmem:[#allocation3 + $0x10] sm:$0xff] %vm1310, %v1295
        %1314 = vst.msk [vmem:[#allocation3 + $0x18] sm:$0xff] %vm1310, %v1296
        %1315 = vst.msk [vmem:[#allocation3 + $0x20] sm:$0xff] %vm1310, %v1297
        %1316 = vst.msk [vmem:[#allocation3 + $0x28] sm:$0xff] %vm1310, %v1298
        %1317 = vst.msk [vmem:[#allocation3 + $0x30] sm:$0xff] %vm1310, %v1299
        %1318 = vst.msk [vmem:[#allocation3 + $0x38] sm:$0xff] %vm1310, %v1300
      $region48: #{tpu_custom_call.1} parent=43 // pred_fallthru
        _
      %s1319 = smul.u32 %s23, 64
      %s1320 = scalar_lea.vmem %s265, %s1319
      %v1321 = vld [vmem:[%s1320] sm:$0xff]
      %v1322 = vld [vmem:[%s1320 + $0x8] sm:$0xff]
      %v1323 = vld [vmem:[%s1320 + $0x10] sm:$0xff]
      %v1324 = vld [vmem:[%s1320 + $0x18] sm:$0xff]
      %v1325 = vld [vmem:[%s1320 + $0x20] sm:$0xff]
      %v1326 = vld [vmem:[%s1320 + $0x28] sm:$0xff]
      %v1327 = vld [vmem:[%s1320 + $0x30] sm:$0xff]
      %v1328 = vld [vmem:[%s1320 + $0x38] sm:$0xff]
      %v1329 = vld [vmem:[%s2] sm:$0xff]
      %v1330 = vld [vmem:[%s2 + $0x8] sm:$0xff]
      %vm1331 = vcmask 130048
      %v1333 = vsel %vm1331, %v1321, 0
      %v1336 = vsel %vm1331, %v1322, 0
      %v1339 = vsel %vm1331, %v1323, 0
      %v1342 = vsel %vm1331, %v1324, 0
      %v1345 = vsel %vm1331, %v1325, 0
      %v1348 = vsel %vm1331, %v1326, 0
      %v1351 = vsel %vm1331, %v1327, 0
      %v1354 = vsel %vm1331, %v1328, 0
      %1356 = vmatprep.subr.mxu0 0.0
      %1357 = vmatpush1.msra.mxu0 %v1329
      %1358 = vmatprep.subr.mxu0 0.0
      %1359 = vmatpush1.msra.mxu0 %v1330
      %1360 = vmatprep.subr.mxu0 0.0
      %1361 = vmatpush1.msra.mxu0 0.0
      %1362 = vmatprep.subr.mxu0 0.0
      %1363 = vmatpush1.msra.mxu0 0.0
      %1364 = vmatprep.subr.mxu0 0.0
      %1365 = vmatpush1.msra.mxu0 0.0
      %1366 = vmatprep.subr.mxu0 0.0
      %1367 = vmatpush1.msra.mxu0 0.0
      %1368 = vmatprep.subr.mxu0 0.0
      %1369 = vmatpush1.msra.mxu0 0.0
      %1370 = vmatprep.subr.mxu0 0.0
      %1371 = vmatpush1.msra.mxu0 0.0
      %1372 = vmatprep.subr.mxu0 0.0
      %1373 = vmatpush1.msra.mxu0 0.0
      %1374 = vmatprep.subr.mxu0 0.0
      %1375 = vmatpush1.msra.mxu0 0.0
      %1376 = vmatprep.subr.mxu0 0.0
      %1377 = vmatpush1.msra.mxu0 0.0
      %1378 = vmatprep.subr.mxu0 0.0
      %1379 = vmatpush1.msra.mxu0 0.0
      %1380 = vmatprep.subr.mxu0 0.0
      %1381 = vmatpush1.msra.mxu0 0.0
      %1382 = vmatprep.subr.mxu0 0.0
      %1383 = vmatpush1.msra.mxu0 0.0
      %1384 = vmatprep.subr.mxu0 0.0
      %1385 = vmatpush1.msra.mxu0 0.0
      %1386 = vmatprep.subr.mxu0 0.0
      %1387 = vmatpush1.msra.mxu0 0.0
      %1388 = vmatprep.subr.mxu0 0.0
      %1389 = vmatpush1.msra.mxu0 0.0
      %1390 = vmatprep.subr.mxu0 0.0
      %1391 = vmatpush1.msra.mxu0 0.0
      %1392 = vmatprep.subr.mxu0 0.0
      %1393 = vmatpush1.msra.mxu0 0.0
      %1394 = vmatprep.subr.mxu0 0.0
      %1395 = vmatpush1.msra.mxu0 0.0
      %1396 = vmatprep.subr.mxu0 0.0
      %1397 = vmatpush1.msra.mxu0 0.0
      %1398 = vmatprep.subr.mxu0 0.0
      %1399 = vmatpush1.msra.mxu0 0.0
      %1400 = vmatprep.subr.mxu0 0.0
      %1401 = vmatpush1.msra.mxu0 0.0
      %1402 = vmatprep.subr.mxu0 0.0
      %1403 = vmatpush1.msra.mxu0 0.0
      %1404 = vmatprep.subr.mxu0 0.0
      %1405 = vmatpush1.msra.mxu0 0.0
      %1406 = vmatprep.subr.mxu0 0.0
      %1407 = vmatpush1.msra.mxu0 0.0
      %1408 = vmatprep.subr.mxu0 0.0
      %1409 = vmatpush1.msra.mxu0 0.0
      %1410 = vmatprep.subr.mxu0 0.0
      %1411 = vmatpush1.msra.mxu0 0.0
      %1412 = vmatprep.subr.mxu0 0.0
      %1413 = vmatpush1.msra.mxu0 0.0
      %1414 = vmatprep.subr.mxu0 0.0
      %1415 = vmatpush1.msra.mxu0 0.0
      %1416 = vmatprep.subr.mxu0 0.0
      %1417 = vmatpush1.msra.mxu0 0.0
      %1418 = vmatprep.subr.mxu0 0.0
      %1419 = vmatpush1.msra.mxu0 0.0
      %1420 = vmatprep.mubr.f32.mxu0 0.0
      %1421 = vmatmul.mubr.f32.gmra.mrb[0].mxu0 %v1333
      %v1422 = vpop.f32.mrb[0].mxu0
      %v1423 = vadd.f32 0.0, %v1422
      %v1424 = vpop.f32.mrb[0].mxu0
      %1425 = vmatprep.mubr.f32.mxu0 0.0
      %1426 = vmatmul.mubr.f32.gmra.mrb[0].mxu0 %v1336
      %v1427 = vpop.f32.mrb[0].mxu0
      %v1428 = vadd.f32 0.0, %v1427
      %v1429 = vpop.f32.mrb[0].mxu0
      %1430 = vmatprep.mubr.f32.mxu0 0.0
      %1431 = vmatmul.mubr.f32.gmra.mrb[0].mxu0 %v1339
      %v1432 = vpop.f32.mrb[0].mxu0
      %v1433 = vadd.f32 0.0, %v1432
      %v1434 = vpop.f32.mrb[0].mxu0
      %1435 = vmatprep.mubr.f32.mxu0 0.0
      %1436 = vmatmul.mubr.f32.gmra.mrb[0].mxu0 %v1342
      %v1437 = vpop.f32.mrb[0].mxu0
      %v1438 = vadd.f32 0.0, %v1437
      %v1439 = vpop.f32.mrb[0].mxu0
      %1440 = vmatprep.mubr.f32.mxu0 0.0
      %1441 = vmatmul.mubr.f32.gmra.mrb[0].mxu0 %v1345
      %v1442 = vpop.f32.mrb[0].mxu0
      %v1443 = vadd.f32 0.0, %v1442
      %v1444 = vpop.f32.mrb[0].mxu0
      %1445 = vmatprep.mubr.f32.mxu0 0.0
      %1446 = vmatmul.mubr.f32.gmra.mrb[0].mxu0 %v1348
      %v1447 = vpop.f32.mrb[0].mxu0
      %v1448 = vadd.f32 0.0, %v1447
      %v1449 = vpop.f32.mrb[0].mxu0
      %1450 = vmatprep.mubr.f32.mxu0 0.0
      %1451 = vmatmul.mubr.f32.gmra.mrb[0].mxu0 %v1351
      %v1452 = vpop.f32.mrb[0].mxu0
      %v1453 = vadd.f32 0.0, %v1452
      %v1454 = vpop.f32.mrb[0].mxu0
      %1455 = vmatprep.mubr.f32.mxu0 0.0
      %1456 = vmatmul.mubr.f32.gmra.mrb[0].mxu0 %v1354
      %v1457 = vpop.f32.mrb[0].mxu0
      %v1458 = vadd.f32 0.0, %v1457
      %v1459 = vpop.f32.mrb[0].mxu0
      %1460 = vdwg.mxu0
      %v1461 = vld [vmem:[#allocation2] sm:$0xff]
      %v1462 = vld [vmem:[#allocation2 + $0x8] sm:$0xff]
      %v1463 = vld [vmem:[#allocation2 + $0x10] sm:$0xff]
      %v1464 = vld [vmem:[#allocation2 + $0x18] sm:$0xff]
      %v1465 = vld [vmem:[#allocation2 + $0x20] sm:$0xff]
      %v1466 = vld [vmem:[#allocation2 + $0x28] sm:$0xff]
      %v1467 = vld [vmem:[#allocation2 + $0x30] sm:$0xff]
      %v1468 = vld [vmem:[#allocation2 + $0x38] sm:$0xff]
      %vm1469 = vcmask 15360
      %v1471 = vsel %vm1469, %v1423, 0
      %v1474 = vsel %vm1469, %v1428, 0
      %v1477 = vsel %vm1469, %v1433, 0
      %v1480 = vsel %vm1469, %v1438, 0
      %v1483 = vsel %vm1469, %v1443, 0
      %v1486 = vsel %vm1469, %v1448, 0
      %v1489 = vsel %vm1469, %v1453, 0
      %v1492 = vsel %vm1469, %v1458, 0
      %v1495 = vsel %vm1469, %v1461, 0
      %v1498 = vsel %vm1469, %v1462, 0
      %v1501 = vsel %vm1469, %v1463, 0
      %v1504 = vsel %vm1469, %v1464, 0
      %v1507 = vsel %vm1469, %v1465, 0
      %v1510 = vsel %vm1469, %v1466, 0
      %v1513 = vsel %vm1469, %v1467, 0
      %v1516 = vsel %vm1469, %v1468, 0
      %1518 = vmatprep.subr.mxu0 0.0
      %1519 = vmatpush1.xpose.msra.mxu0 %v1495
      %1520 = vmatprep.subr.mxu0 0.0
      %1521 = vmatpush1.xpose.msra.mxu0 %v1498
      %1522 = vmatprep.subr.mxu0 0.0
      %1523 = vmatpush1.xpose.msra.mxu0 %v1501
      %1524 = vmatprep.subr.mxu0 0.0
      %1525 = vmatpush1.xpose.msra.mxu0 %v1504
      %1526 = vmatprep.subr.mxu0 0.0
      %1527 = vmatpush1.xpose.msra.mxu0 %v1507
      %1528 = vmatprep.subr.mxu0 0.0
      %1529 = vmatpush1.xpose.msra.mxu0 %v1510
      %1530 = vmatprep.subr.mxu0 0.0
      %1531 = vmatpush1.xpose.msra.mxu0 %v1513
      %1532 = vmatprep.subr.mxu0 0.0
      %1533 = vmatpush1.xpose.msra.mxu0 %v1516
      %1534 = vmatprep.subr.mxu0 0.0
      %1535 = vmatpush1.xpose.msra.mxu0 0.0
      %1536 = vmatprep.subr.mxu0 0.0
      %1537 = vmatpush1.xpose.msra.mxu0 0.0
      %1538 = vmatprep.subr.mxu0 0.0
      %1539 = vmatpush1.xpose.msra.mxu0 0.0
      %1540 = vmatprep.subr.mxu0 0.0
      %1541 = vmatpush1.xpose.msra.mxu0 0.0
      %1542 = vmatprep.subr.mxu0 0.0
      %1543 = vmatpush1.xpose.msra.mxu0 0.0
      %1544 = vmatprep.subr.mxu0 0.0
      %1545 = vmatpush1.xpose.msra.mxu0 0.0
      %1546 = vmatprep.subr.mxu0 0.0
      %1547 = vmatpush1.xpose.msra.mxu0 0.0
      %1548 = vmatprep.subr.mxu0 0.0
      %1549 = vmatpush1.xpose.msra.mxu0 0.0
      %1550 = vmatprep.subr.mxu0 0.0
      %1551 = vmatpush1.xpose.msra.mxu0 0.0
      %1552 = vmatprep.subr.mxu0 0.0
      %1553 = vmatpush1.xpose.msra.mxu0 0.0
      %1554 = vmatprep.subr.mxu0 0.0
      %1555 = vmatpush1.xpose.msra.mxu0 0.0
      %1556 = vmatprep.subr.mxu0 0.0
      %1557 = vmatpush1.xpose.msra.mxu0 0.0
      %1558 = vmatprep.subr.mxu0 0.0
      %1559 = vmatpush1.xpose.msra.mxu0 0.0
      %1560 = vmatprep.subr.mxu0 0.0
      %1561 = vmatpush1.xpose.msra.mxu0 0.0
      %1562 = vmatprep.subr.mxu0 0.0
      %1563 = vmatpush1.xpose.msra.mxu0 0.0
      %1564 = vmatprep.subr.mxu0 0.0
      %1565 = vmatpush1.xpose.msra.mxu0 0.0
      %1566 = vmatprep.subr.mxu0 0.0
      %1567 = vmatpush1.xpose.msra.mxu0 0.0
      %1568 = vmatprep.subr.mxu0 0.0
      %1569 = vmatpush1.xpose.msra.mxu0 0.0
      %1570 = vmatprep.subr.mxu0 0.0
      %1571 = vmatpush1.xpose.msra.mxu0 0.0
      %1572 = vmatprep.subr.mxu0 0.0
      %1573 = vmatpush1.xpose.msra.mxu0 0.0
      %1574 = vmatprep.subr.mxu0 0.0
      %1575 = vmatpush1.xpose.msra.mxu0 0.0
      %1576 = vmatprep.subr.mxu0 0.0
      %1577 = vmatpush1.xpose.msra.mxu0 0.0
      %1578 = vmatprep.subr.mxu0 0.0
      %1579 = vmatpush1.xpose.msra.mxu0 0.0
      %1580 = vmatprep.subr.mxu0 0.0
      %1581 = vmatpush1.xpose.msra.mxu0 0.0
      %1582 = vmatprep.mubr.f32.mxu0 0.0
      %1583 = vmatmul.mubr.f32.gmra.mrb[0].mxu0 %v1471
      %v1584 = vpop.f32.mrb[0].mxu0
      %v1585 = vadd.f32 0.0, %v1584
      %v1586 = vpop.f32.mrb[0].mxu0
      %1587 = vmatprep.mubr.f32.mxu0 0.0
      %1588 = vmatmul.mubr.f32.gmra.mrb[0].mxu0 %v1474
      %v1589 = vpop.f32.mrb[0].mxu0
      %v1590 = vadd.f32 0.0, %v1589
      %v1591 = vpop.f32.mrb[0].mxu0
      %1592 = vmatprep.mubr.f32.mxu0 0.0
      %1593 = vmatmul.mubr.f32.gmra.mrb[0].mxu0 %v1477
      %v1594 = vpop.f32.mrb[0].mxu0
      %v1595 = vadd.f32 0.0, %v1594
      %v1596 = vpop.f32.mrb[0].mxu0
      %1597 = vmatprep.mubr.f32.mxu0 0.0
      %1598 = vmatmul.mubr.f32.gmra.mrb[0].mxu0 %v1480
      %v1599 = vpop.f32.mrb[0].mxu0
      %v1600 = vadd.f32 0.0, %v1599
      %v1601 = vpop.f32.mrb[0].mxu0
      %1602 = vmatprep.mubr.f32.mxu0 0.0
      %1603 = vmatmul.mubr.f32.gmra.mrb[0].mxu0 %v1483
      %v1604 = vpop.f32.mrb[0].mxu0
      %v1605 = vadd.f32 0.0, %v1604
      %v1606 = vpop.f32.mrb[0].mxu0
      %1607 = vmatprep.mubr.f32.mxu0 0.0
      %1608 = vmatmul.mubr.f32.gmra.mrb[0].mxu0 %v1486
      %v1609 = vpop.f32.mrb[0].mxu0
      %v1610 = vadd.f32 0.0, %v1609
      %v1611 = vpop.f32.mrb[0].mxu0
      %1612 = vmatprep.mubr.f32.mxu0 0.0
      %1613 = vmatmul.mubr.f32.gmra.mrb[0].mxu0 %v1489
      %v1614 = vpop.f32.mrb[0].mxu0
      %v1615 = vadd.f32 0.0, %v1614
      %v1616 = vpop.f32.mrb[0].mxu0
      %1617 = vmatprep.mubr.f32.mxu0 0.0
      %1618 = vmatmul.mubr.f32.gmra.mrb[0].mxu0 %v1492
      %v1619 = vpop.f32.mrb[0].mxu0
      %v1620 = vadd.f32 0.0, %v1619
      %v1621 = vpop.f32.mrb[0].mxu0
      %1622 = vdwg.mxu0
      %vm1623 = vcmask 523264
      %v1624 = vsel %vm1623, %v1585, -inf
      %1625 = vmax.xlane.f32.xlu0 %v1624
      %v1626 = vpop.xlane.xlu0 %1625
      %v1627 = vsel %vm1623, %v1590, -inf
      %1628 = vmax.xlane.f32.xlu0 %v1627
      %v1629 = vpop.xlane.xlu0 %1628
      %v1630 = vsel %vm1623, %v1595, -inf
      %1631 = vmax.xlane.f32.xlu0 %v1630
      %v1632 = vpop.xlane.xlu0 %1631
      %v1633 = vsel %vm1623, %v1600, -inf
      %1634 = vmax.xlane.f32.xlu0 %v1633
      %v1635 = vpop.xlane.xlu0 %1634
      %v1636 = vsel %vm1623, %v1605, -inf
      %1637 = vmax.xlane.f32.xlu0 %v1636
      %v1638 = vpop.xlane.xlu0 %1637
      %v1639 = vsel %vm1623, %v1610, -inf
      %1640 = vmax.xlane.f32.xlu0 %v1639
      %v1641 = vpop.xlane.xlu0 %1640
      %v1642 = vsel %vm1623, %v1615, -inf
      %1643 = vmax.xlane.f32.xlu0 %v1642
      %v1644 = vpop.xlane.xlu0 %1643
      %v1645 = vsel %vm1623, %v1620, -inf
      %1646 = vmax.xlane.f32.xlu0 %v1645
      %v1647 = vpop.xlane.xlu0 %1646
      %v1648 = vsub.f32 %v1585, %v1626
      %v1649 = vsub.f32 %v1590, %v1629
      %v1650 = vsub.f32 %v1595, %v1632
      %v1651 = vsub.f32 %v1600, %v1635
      %v1652 = vsub.f32 %v1605, %v1638
      %v1653 = vsub.f32 %v1610, %v1641
      %v1654 = vsub.f32 %v1615, %v1644
      %v1655 = vsub.f32 %v1620, %v1647
      %v1656 = vmul.f32 %v1648, 1.442695
      %v1657 = vpow.pop %v1656
      %v1658 = vmul.f32 %v1649, 1.442695
      %v1659 = vpow.pop %v1658
      %v1660 = vmul.f32 %v1650, 1.442695
      %v1661 = vpow.pop %v1660
      %v1662 = vmul.f32 %v1651, 1.442695
      %v1663 = vpow.pop %v1662
      %v1664 = vmul.f32 %v1652, 1.442695
      %v1665 = vpow.pop %v1664
      %v1666 = vmul.f32 %v1653, 1.442695
      %v1667 = vpow.pop %v1666
      %v1668 = vmul.f32 %v1654, 1.442695
      %v1669 = vpow.pop %v1668
      %v1670 = vmul.f32 %v1655, 1.442695
      %v1671 = vpow.pop %v1670
      %v1672 = vsel %vm1623, %v1657, 0.0
      %1673 = vadd.xlane.f32.xlu0 %v1672
      %v1674 = vpop.xlane.xlu0 %1673
      %v1675 = vsel %vm1623, %v1659, 0.0
      %1676 = vadd.xlane.f32.xlu0 %v1675
      %v1677 = vpop.xlane.xlu0 %1676
      %v1678 = vsel %vm1623, %v1661, 0.0
      %1679 = vadd.xlane.f32.xlu0 %v1678
      %v1680 = vpop.xlane.xlu0 %1679
      %v1681 = vsel %vm1623, %v1663, 0.0
      %1682 = vadd.xlane.f32.xlu0 %v1681
      %v1683 = vpop.xlane.xlu0 %1682
      %v1684 = vsel %vm1623, %v1665, 0.0
      %1685 = vadd.xlane.f32.xlu0 %v1684
      %v1686 = vpop.xlane.xlu0 %1685
      %v1687 = vsel %vm1623, %v1667, 0.0
      %1688 = vadd.xlane.f32.xlu0 %v1687
      %v1689 = vpop.xlane.xlu0 %1688
      %v1690 = vsel %vm1623, %v1669, 0.0
      %1691 = vadd.xlane.f32.xlu0 %v1690
      %v1692 = vpop.xlane.xlu0 %1691
      %v1693 = vsel %vm1623, %v1671, 0.0
      %1694 = vadd.xlane.f32.xlu0 %v1693
      %v1695 = vpop.xlane.xlu0 %1694
      %v1696 = vld [vmem:[#allocation3] sm:$0xff]
      %v1697 = vld [vmem:[#allocation3 + $0x8] sm:$0xff]
      %v1698 = vld [vmem:[#allocation3 + $0x10] sm:$0xff]
      %v1699 = vld [vmem:[#allocation3 + $0x18] sm:$0xff]
      %v1700 = vld [vmem:[#allocation3 + $0x20] sm:$0xff]
      %v1701 = vld [vmem:[#allocation3 + $0x28] sm:$0xff]
      %v1702 = vld [vmem:[#allocation3 + $0x30] sm:$0xff]
      %v1703 = vld [vmem:[#allocation3 + $0x38] sm:$0xff]
      %v1705 = vsel %vm1623, %v1657, 0
      %v1708 = vsel %vm1623, %v1659, 0
      %v1711 = vsel %vm1623, %v1661, 0
      %v1714 = vsel %vm1623, %v1663, 0
      %v1717 = vsel %vm1623, %v1665, 0
      %v1720 = vsel %vm1623, %v1667, 0
      %v1723 = vsel %vm1623, %v1669, 0
      %v1726 = vsel %vm1623, %v1671, 0
      %1728 = vmatprep.subr.mxu0 0.0
      %1729 = vmatpush1.msra.mxu0 %v1696
      %1730 = vmatprep.subr.mxu0 0.0
      %1731 = vmatpush1.msra.mxu0 %v1697
      %1732 = vmatprep.subr.mxu0 0.0
      %1733 = vmatpush1.msra.mxu0 %v1698
      %1734 = vmatprep.subr.mxu0 0.0
      %1735 = vmatpush1.msra.mxu0 %v1699
      %1736 = vmatprep.subr.mxu0 0.0
      %1737 = vmatpush1.msra.mxu0 %v1700
      %1738 = vmatprep.subr.mxu0 0.0
      %1739 = vmatpush1.msra.mxu0 %v1701
      %1740 = vmatprep.subr.mxu0 0.0
      %1741 = vmatpush1.msra.mxu0 %v1702
      %1742 = vmatprep.subr.mxu0 0.0
      %1743 = vmatpush1.msra.mxu0 %v1703
      %1744 = vmatprep.subr.mxu0 0.0
      %1745 = vmatpush1.msra.mxu0 0.0
      %1746 = vmatprep.subr.mxu0 0.0
      %1747 = vmatpush1.msra.mxu0 0.0
      %1748 = vmatprep.subr.mxu0 0.0
      %1749 = vmatpush1.msra.mxu0 0.0
      %1750 = vmatprep.subr.mxu0 0.0
      %1751 = vmatpush1.msra.mxu0 0.0
      %1752 = vmatprep.subr.mxu0 0.0
      %1753 = vmatpush1.msra.mxu0 0.0
      %1754 = vmatprep.subr.mxu0 0.0
      %1755 = vmatpush1.msra.mxu0 0.0
      %1756 = vmatprep.subr.mxu0 0.0
      %1757 = vmatpush1.msra.mxu0 0.0
      %1758 = vmatprep.subr.mxu0 0.0
      %1759 = vmatpush1.msra.mxu0 0.0
      %1760 = vmatprep.subr.mxu0 0.0
      %1761 = vmatpush1.msra.mxu0 0.0
      %1762 = vmatprep.subr.mxu0 0.0
      %1763 = vmatpush1.msra.mxu0 0.0
      %1764 = vmatprep.subr.mxu0 0.0
      %1765 = vmatpush1.msra.mxu0 0.0
      %1766 = vmatprep.subr.mxu0 0.0
      %1767 = vmatpush1.msra.mxu0 0.0
      %1768 = vmatprep.subr.mxu0 0.0
      %1769 = vmatpush1.msra.mxu0 0.0
      %1770 = vmatprep.subr.mxu0 0.0
      %1771 = vmatpush1.msra.mxu0 0.0
      %1772 = vmatprep.subr.mxu0 0.0
      %1773 = vmatpush1.msra.mxu0 0.0
      %1774 = vmatprep.subr.mxu0 0.0
      %1775 = vmatpush1.msra.mxu0 0.0
      %1776 = vmatprep.subr.mxu0 0.0
      %1777 = vmatpush1.msra.mxu0 0.0
      %1778 = vmatprep.subr.mxu0 0.0
      %1779 = vmatpush1.msra.mxu0 0.0
      %1780 = vmatprep.subr.mxu0 0.0
      %1781 = vmatpush1.msra.mxu0 0.0
      %1782 = vmatprep.subr.mxu0 0.0
      %1783 = vmatpush1.msra.mxu0 0.0
      %1784 = vmatprep.subr.mxu0 0.0
      %1785 = vmatpush1.msra.mxu0 0.0
      %1786 = vmatprep.subr.mxu0 0.0
      %1787 = vmatpush1.msra.mxu0 0.0
      %1788 = vmatprep.subr.mxu0 0.0
      %1789 = vmatpush1.msra.mxu0 0.0
      %1790 = vmatprep.subr.mxu0 0.0
      %1791 = vmatpush1.msra.mxu0 0.0
      %1792 = vmatprep.mubr.f32.mxu0 0.0
      %1793 = vmatmul.mubr.f32.gmra.mrb[0].mxu0 %v1705
      %v1794 = vpop.f32.mrb[0].mxu0
      %v1795 = vadd.f32 0.0, %v1794
      %v1796 = vpop.f32.mrb[0].mxu0
      %1797 = vmatprep.mubr.f32.mxu0 0.0
      %1798 = vmatmul.mubr.f32.gmra.mrb[0].mxu0 %v1708
      %v1799 = vpop.f32.mrb[0].mxu0
      %v1800 = vadd.f32 0.0, %v1799
      %v1801 = vpop.f32.mrb[0].mxu0
      %1802 = vmatprep.mubr.f32.mxu0 0.0
      %1803 = vmatmul.mubr.f32.gmra.mrb[0].mxu0 %v1711
      %v1804 = vpop.f32.mrb[0].mxu0
      %v1805 = vadd.f32 0.0, %v1804
      %v1806 = vpop.f32.mrb[0].mxu0
      %1807 = vmatprep.mubr.f32.mxu0 0.0
      %1808 = vmatmul.mubr.f32.gmra.mrb[0].mxu0 %v1714
      %v1809 = vpop.f32.mrb[0].mxu0
      %v1810 = vadd.f32 0.0, %v1809
      %v1811 = vpop.f32.mrb[0].mxu0
      %1812 = vmatprep.mubr.f32.mxu0 0.0
      %1813 = vmatmul.mubr.f32.gmra.mrb[0].mxu0 %v1717
      %v1814 = vpop.f32.mrb[0].mxu0
      %v1815 = vadd.f32 0.0, %v1814
      %v1816 = vpop.f32.mrb[0].mxu0
      %1817 = vmatprep.mubr.f32.mxu0 0.0
      %1818 = vmatmul.mubr.f32.gmra.mrb[0].mxu0 %v1720
      %v1819 = vpop.f32.mrb[0].mxu0
      %v1820 = vadd.f32 0.0, %v1819
      %v1821 = vpop.f32.mrb[0].mxu0
      %1822 = vmatprep.mubr.f32.mxu0 0.0
      %1823 = vmatmul.mubr.f32.gmra.mrb[0].mxu0 %v1723
      %v1824 = vpop.f32.mrb[0].mxu0
      %v1825 = vadd.f32 0.0, %v1824
      %v1826 = vpop.f32.mrb[0].mxu0
      %1827 = vmatprep.mubr.f32.mxu0 0.0
      %1828 = vmatmul.mubr.f32.gmra.mrb[0].mxu0 %v1726
      %v1829 = vpop.f32.mrb[0].mxu0
      %v1830 = vadd.f32 0.0, %v1829
      %v1831 = vpop.f32.mrb[0].mxu0
      %1832 = vdwg.mxu0
      %v1833 = vrcp.pop %v1674
      %v1834 = vrcp.pop %v1677
      %v1835 = vrcp.pop %v1680
      %v1836 = vrcp.pop %v1683
      %v1837 = vrcp.pop %v1686
      %v1838 = vrcp.pop %v1689
      %v1839 = vrcp.pop %v1692
      %v1840 = vrcp.pop %v1695
      %v1841 = vmul.f32 %v1795, %v1833
      %v1842 = vmul.f32 %v1800, %v1834
      %v1843 = vmul.f32 %v1805, %v1835
      %v1844 = vmul.f32 %v1810, %v1836
      %v1845 = vmul.f32 %v1815, %v1837
      %v1846 = vmul.f32 %v1820, %v1838
      %v1847 = vmul.f32 %v1825, %v1839
      %v1848 = vmul.f32 %v1830, %v1840
      %v1849 = vld [vmem:[%s5] sm:$0xff]
      %vm1850 = vcmask 64512
      %v1852 = vsel %vm1850, %v1841, 0
      %v1855 = vsel %vm1850, %v1842, 0
      %v1858 = vsel %vm1850, %v1843, 0
      %v1861 = vsel %vm1850, %v1844, 0
      %v1864 = vsel %vm1850, %v1845, 0
      %v1867 = vsel %vm1850, %v1846, 0
      %v1870 = vsel %vm1850, %v1847, 0
      %v1873 = vsel %vm1850, %v1848, 0
      %1875 = vmatprep.subr.mxu0 0.0
      %1876 = vmatpush1.msra.mxu0 %v1849
      %1877 = vmatprep.subr.mxu0 0.0
      %1878 = vmatpush1.msra.mxu0 0.0
      %1879 = vmatprep.subr.mxu0 0.0
      %1880 = vmatpush1.msra.mxu0 0.0
      %1881 = vmatprep.subr.mxu0 0.0
      %1882 = vmatpush1.msra.mxu0 0.0
      %1883 = vmatprep.subr.mxu0 0.0
      %1884 = vmatpush1.msra.mxu0 0.0
      %1885 = vmatprep.subr.mxu0 0.0
      %1886 = vmatpush1.msra.mxu0 0.0
      %1887 = vmatprep.subr.mxu0 0.0
      %1888 = vmatpush1.msra.mxu0 0.0
      %1889 = vmatprep.subr.mxu0 0.0
      %1890 = vmatpush1.msra.mxu0 0.0
      %1891 = vmatprep.subr.mxu0 0.0
      %1892 = vmatpush1.msra.mxu0 0.0
      %1893 = vmatprep.subr.mxu0 0.0
      %1894 = vmatpush1.msra.mxu0 0.0
      %1895 = vmatprep.subr.mxu0 0.0
      %1896 = vmatpush1.msra.mxu0 0.0
      %1897 = vmatprep.subr.mxu0 0.0
      %1898 = vmatpush1.msra.mxu0 0.0
      %1899 = vmatprep.subr.mxu0 0.0
      %1900 = vmatpush1.msra.mxu0 0.0
      %1901 = vmatprep.subr.mxu0 0.0
      %1902 = vmatpush1.msra.mxu0 0.0
      %1903 = vmatprep.subr.mxu0 0.0
      %1904 = vmatpush1.msra.mxu0 0.0
      %1905 = vmatprep.subr.mxu0 0.0
      %1906 = vmatpush1.msra.mxu0 0.0
      %1907 = vmatprep.subr.mxu0 0.0
      %1908 = vmatpush1.msra.mxu0 0.0
      %1909 = vmatprep.subr.mxu0 0.0
      %1910 = vmatpush1.msra.mxu0 0.0
      %1911 = vmatprep.subr.mxu0 0.0
      %1912 = vmatpush1.msra.mxu0 0.0
      %1913 = vmatprep.subr.mxu0 0.0
      %1914 = vmatpush1.msra.mxu0 0.0
      %1915 = vmatprep.subr.mxu0 0.0
      %1916 = vmatpush1.msra.mxu0 0.0
      %1917 = vmatprep.subr.mxu0 0.0
      %1918 = vmatpush1.msra.mxu0 0.0
      %1919 = vmatprep.subr.mxu0 0.0
      %1920 = vmatpush1.msra.mxu0 0.0
      %1921 = vmatprep.subr.mxu0 0.0
      %1922 = vmatpush1.msra.mxu0 0.0
      %1923 = vmatprep.subr.mxu0 0.0
      %1924 = vmatpush1.msra.mxu0 0.0
      %1925 = vmatprep.subr.mxu0 0.0
      %1926 = vmatpush1.msra.mxu0 0.0
      %1927 = vmatprep.subr.mxu0 0.0
      %1928 = vmatpush1.msra.mxu0 0.0
      %1929 = vmatprep.subr.mxu0 0.0
      %1930 = vmatpush1.msra.mxu0 0.0
      %1931 = vmatprep.subr.mxu0 0.0
      %1932 = vmatpush1.msra.mxu0 0.0
      %1933 = vmatprep.subr.mxu0 0.0
      %1934 = vmatpush1.msra.mxu0 0.0
      %1935 = vmatprep.subr.mxu0 0.0
      %1936 = vmatpush1.msra.mxu0 0.0
      %1937 = vmatprep.subr.mxu0 0.0
      %1938 = vmatpush1.msra.mxu0 0.0
      %1939 = vmatprep.mubr.f32.mxu0 0.0
      %1940 = vmatmul.mubr.f32.gmra.mrb[0].mxu0 %v1852
      %v1941 = vpop.f32.mrb[0].mxu0
      %v1942 = vadd.f32 0.0, %v1941
      %v1943 = vpop.f32.mrb[0].mxu0
      %1944 = vmatprep.mubr.f32.mxu0 0.0
      %1945 = vmatmul.mubr.f32.gmra.mrb[0].mxu0 %v1855
      %v1946 = vpop.f32.mrb[0].mxu0
      %v1947 = vadd.f32 0.0, %v1946
      %v1948 = vpop.f32.mrb[0].mxu0
      %1949 = vmatprep.mubr.f32.mxu0 0.0
      %1950 = vmatmul.mubr.f32.gmra.mrb[0].mxu0 %v1858
      %v1951 = vpop.f32.mrb[0].mxu0
      %v1952 = vadd.f32 0.0, %v1951
      %v1953 = vpop.f32.mrb[0].mxu0
      %1954 = vmatprep.mubr.f32.mxu0 0.0
      %1955 = vmatmul.mubr.f32.gmra.mrb[0].mxu0 %v1861
      %v1956 = vpop.f32.mrb[0].mxu0
      %v1957 = vadd.f32 0.0, %v1956
      %v1958 = vpop.f32.mrb[0].mxu0
      %1959 = vmatprep.mubr.f32.mxu0 0.0
      %1960 = vmatmul.mubr.f32.gmra.mrb[0].mxu0 %v1864
      %v1961 = vpop.f32.mrb[0].mxu0
      %v1962 = vadd.f32 0.0, %v1961
      %v1963 = vpop.f32.mrb[0].mxu0
      %1964 = vmatprep.mubr.f32.mxu0 0.0
      %1965 = vmatmul.mubr.f32.gmra.mrb[0].mxu0 %v1867
      %v1966 = vpop.f32.mrb[0].mxu0
      %v1967 = vadd.f32 0.0, %v1966
      %v1968 = vpop.f32.mrb[0].mxu0
      %1969 = vmatprep.mubr.f32.mxu0 0.0
      %1970 = vmatmul.mubr.f32.gmra.mrb[0].mxu0 %v1870
      %v1971 = vpop.f32.mrb[0].mxu0
      %v1972 = vadd.f32 0.0, %v1971
      %v1973 = vpop.f32.mrb[0].mxu0
      %1974 = vmatprep.mubr.f32.mxu0 0.0
      %1975 = vmatmul.mubr.f32.gmra.mrb[0].mxu0 %v1873
      %v1976 = vpop.f32.mrb[0].mxu0
      %v1977 = vadd.f32 0.0, %v1976
      %v1978 = vpop.f32.mrb[0].mxu0
      %1979 = vdwg.mxu0
      %s1980 = sld [smem:[#allocation4]]
      %v1981 = vstv %s1980
      %v1982 = vmul.f32 %v1981, %v1942
      %v1983 = vmul.f32 %v1981, %v1947
      %v1984 = vmul.f32 %v1981, %v1952
      %v1985 = vmul.f32 %v1981, %v1957
      %v1986 = vmul.f32 %v1981, %v1962
      %v1987 = vmul.f32 %v1981, %v1967
      %v1988 = vmul.f32 %v1981, %v1972
      %v1989 = vmul.f32 %v1981, %v1977
      %v1990 = vadd.f32 %v1982, %v1321
      %v1991 = vadd.f32 %v1983, %v1322
      %v1992 = vadd.f32 %v1984, %v1323
      %v1993 = vadd.f32 %v1985, %v1324
      %v1994 = vadd.f32 %v1986, %v1325
      %v1995 = vadd.f32 %v1987, %v1326
      %v1996 = vadd.f32 %v1988, %v1327
      %v1997 = vadd.f32 %v1989, %v1328
      %1998 = vst.msk [vmem:[%s274] sm:$0xff] %vm1331, %v1990
      %1999 = vst.msk [vmem:[%s274 + $0x8] sm:$0xff] %vm1331, %v1991
      %2000 = vst.msk [vmem:[%s274 + $0x10] sm:$0xff] %vm1331, %v1992
      %2001 = vst.msk [vmem:[%s274 + $0x18] sm:$0xff] %vm1331, %v1993
      %2002 = vst.msk [vmem:[%s274 + $0x20] sm:$0xff] %vm1331, %v1994
      %2003 = vst.msk [vmem:[%s274 + $0x28] sm:$0xff] %vm1331, %v1995
      %2004 = vst.msk [vmem:[%s274 + $0x30] sm:$0xff] %vm1331, %v1996
      %2005 = vst.msk [vmem:[%s274 + $0x38] sm:$0xff] %vm1331, %v1997
      %s2006 = smul.u32 8, %s23
      %p2007 = scmp.lt.s32.totalorder %s22, 1
      %s2008 = scalar_select %p2007, %s22, 1
      %p2009 = scmp.lt.s32.totalorder %s2006, 31
      %s2010 = scalar_select %p2009, %s2006, 31
      %s2011 = smul.addr %s2008, 32
      %s2012 = sadd.s32 %s2010, %s2011
      %s2013 = smul.addr %s2012, 8
      %s2014 = scalar_lea.vmem %s6, %s2013
      // Predicated region
      $region49: #{tpu_custom_call.1} parent=43 // pred_check
        %p2015 = pneg %p181
      $region50: #{tpu_custom_call.1} parent=43 // pred_check_branch
        %2017 = sbr.rel (%p2015) target = $region52
      $region51: #{tpu_custom_call.1} parent=43 // pred_region
        %s2018 = smul.u32 8, %s23
      $region52: #{tpu_custom_call.1} parent=43 // pred_fallthru
        _
    $region44: #{tpu_custom_call.1} parent=5 // pred_fallthru
      _
    %p2019 = scmp.le.s32.totalorder 2, %s13
    // Predicated region
    $region53: #{tpu_custom_call.1} parent=5 // pred_check
      %p2020 = pneg %p2019
    $region54: #{tpu_custom_call.1} parent=5 // pred_check_branch
      %2022 = sbr.rel (%p2020) target = $region56
    $region55: #{tpu_custom_call.1} parent=5 // pred_region
      %s2023 = ssub.s32 %s13, 2
      // Predicated region
      $region57: #{tpu_custom_call.1} parent=55 // pred_check
        %p2024 = pneg %p187
      $region58: #{tpu_custom_call.1} parent=55 // pred_check_branch
        %2026 = sbr.rel (%p2024) target = $region60
      $region59: #{tpu_custom_call.1} parent=55 // pred_region
        %s2027 = smul.u32 8, %s25
        %p2028 = scmp.lt.s32.totalorder %s24, 1
        %s2029 = scalar_select %p2028, %s24, 1
        %p2030 = scmp.lt.s32.totalorder %s2027, 31
        %s2031 = scalar_select %p2030, %s2027, 31
        %s2032 = smul.addr %s2029, 32
        %s2033 = sadd.s32 %s2031, %s2032
        %s2034 = smul.addr %s2033, 8
        %s2035 = scalar_lea.vmem %s6, %s2034
      $region60: #{tpu_custom_call.1} parent=55 // pred_fallthru
        _
    $region56: #{tpu_custom_call.1} parent=5 // pred_fallthru
      _
  $region6: #{tpu_custom_call.1} parent=0 // loop_footer
    %s17 = sadd.s32 1, %s13
  $region7: #{tpu_custom_call.1} parent=0 // loop_footer_branch
    %12 = sbr.rel target = $region3
  $region8: #{tpu_custom_call.1} parent=0 // loop_exit
    _

</llo_original>
